<compile_context>
chip_gen: v6e
topology: v6e:2x2x1
jax: 0.10.0
libtpu: 0.0.40
codegen_flags: <defaults>
</compile_context>

<pallas_src>
import functools

import jax
import jax.numpy as jnp
from jax.experimental import pallas as pl
from jax.experimental.pallas import tpu as pltpu

# Hyper-parameters implied by forward(): classes.view(B, 40), code.view(B, 4),
# 1x1 spatial output of a 4x4 valid conv => n_classes=40, code_dim=4, input 4x4.
N_CLASSES = 40
CODE_DIM = 4
C_IN = 256
C_MID = 128
KSIZE = 4
K_FLAT = C_IN * KSIZE * KSIZE          # 4096
HEAD_DIM = 128                         # lane-padded fused head width
BN_EPS = 1e-5
LEAKY_SLOPE = 0.1


def _round_up(x, m):
    return ((x + m - 1) // m) * m


def _cdiv(a, b):
    return -(-a // b)


def _tiles_pass1(b):
    # Single tile (full batch) for small batches; otherwise >=2 tiles (v7x
    # megacore split), multiple of 8 rows, capped at 512 rows so the f32 input
    # block (8 MiB) double-buffers inside the 32 MiB scoped-VMEM limit.
    if b <= 256:
        return b, 1
    tb = min(512, _round_up(_cdiv(b, 2), 8))
    return tb, _cdiv(b, tb)


def _tiles_pass2(n):
    # Pass-2 blocks are only (tb, 128); use big tiles to amortize grid overhead,
    # splitting into >=2 tiles for large batches.
    if n <= 1024:
        return n, 1
    tb = min(2048, _round_up(_cdiv(n, 2), 8))
    return tb, _cdiv(n, tb)


# --------------------------------------------------------------------------
# Pass 1: conv-as-matmul (in-kernel bf16 cast) + per-tile BN partial stats.
# --------------------------------------------------------------------------
def _conv_stats_kernel(x_ref, w_ref, h_ref, stats_ref, *, batch, tile):
    # x_ref: (tile, 4096) f32   — cast to bf16 here (no extra HBM copy of x)
    # w_ref: (4096, 128) bf16   — pre-transposed (K, N) layout, no in-body relayout
    x = x_ref[...].astype(jnp.bfloat16)
    h = jnp.dot(x, w_ref[...], preferred_element_type=jnp.float32)   # (tile, 128) f32
    h_ref[...] = h.astype(jnp.bfloat16)

    # Partial batch statistics. The last block may be ragged (rows >= batch hold
    # unspecified data), so mask them out of the reductions.
    row = pl.program_id(0) * tile + jax.lax.broadcasted_iota(
        jnp.int32, (tile, 1), 0)
    hv = jnp.where(row < batch, h, 0.0)
    stats_ref[0:1, :] = jnp.sum(hv, axis=0, keepdims=True)           # sum
    stats_ref[1:2, :] = jnp.sum(hv * hv, axis=0, keepdims=True)      # sum of squares


# --------------------------------------------------------------------------
# Pass 2: in-kernel BN finalize + folded BN + LeakyReLU + fused lane-dense heads.
# --------------------------------------------------------------------------
def _bn_heads_kernel(h_ref, stats_ref, bn_ref, w_ref, b_ref, out_ref, *, batch):
    # Finish BN statistics over the FULL batch (tiny 128-wide VPU work).
    stats = jnp.sum(stats_ref[...], axis=0)                          # (2, 128)
    inv_b = 1.0 / batch
    mean = stats[0:1, :] * inv_b
    # TODO(synk): E[x^2]-E[x]^2 in f32; a shifted/Welford form would be more
    # robust for very large batches/activations (clamped at 0 here).
    var = jnp.maximum(stats[1:2, :] * inv_b - mean * mean, 0.0)
    inv = jax.lax.rsqrt(var + BN_EPS)
    scale = bn_ref[0:1, :] * inv                                     # gamma * inv_std
    shift = bn_ref[1:2, :] - mean * scale                            # beta - mean*scale

    # Folded BatchNorm (single FMA) + LeakyReLU(0.1).
    a = h_ref[...].astype(jnp.float32) * scale + shift               # (tb, 128)
    a = jnp.where(a >= 0, a, LEAKY_SLOPE * a)

    # Single fused head matmul in natural (K, N) layout:
    # lanes 0:40 = class logits, lanes 40:44 = code logits, rest zero-padded.
    logits = jnp.dot(a.astype(jnp.bfloat16), w_ref[...],
                     preferred_element_type=jnp.float32) + b_ref[...]  # (tb, 128)

    lane = jax.lax.broadcasted_iota(jnp.int32, logits.shape, 1)
    is_cls = lane < N_CLASSES

    # Softmax over the class lanes only (padded lanes masked to -inf).
    cls_logits = jnp.where(is_cls, logits, -1e30)
    m = jnp.max(cls_logits, axis=-1, keepdims=True)
    e = jnp.exp(cls_logits - m)
    probs = e / jnp.sum(e, axis=-1, keepdims=True)                   # exact divide
    # Sigmoid on all lanes; only lanes [40:44) are consumed by the wrapper.
    sig = 1.0 / (1.0 + jnp.exp(-logits))

    out_ref[...] = jnp.where(is_cls, probs, sig)


# --------------------------------------------------------------------------
# One-time constant weight preparation (cached outside the hot path).
# --------------------------------------------------------------------------
def prepare_params(params):
    w1_t = params["w_conv"].reshape(C_MID, K_FLAT).T.astype(jnp.bfloat16)   # (4096, 128)

    wc = params["w_cls"].reshape(N_CLASSES, C_MID)
    wz = params["w_code"].reshape(CODE_DIM, C_MID)
    w_heads = jnp.zeros((HEAD_DIM, C_MID), jnp.float32)
    w_heads = w_heads.at[:N_CLASSES].set(wc)
    w_heads = w_heads.at[N_CLASSES:N_CLASSES + CODE_DIM].set(wz)
    w_heads_t = w_heads.T.astype(jnp.bfloat16)                              # (128, 128)

    b_heads = jnp.zeros((1, HEAD_DIM), jnp.float32)
    b_heads = b_heads.at[0, :N_CLASSES].set(params["b_cls"])
    b_heads = b_heads.at[0, N_CLASSES:N_CLASSES + CODE_DIM].set(params["b_code"])

    bn = jnp.stack([params["bn_gamma"], params["bn_beta"]], axis=0)          # (2, 128)
    return {"w1_t": w1_t, "w_heads_t": w_heads_t, "b_heads": b_heads, "bn": bn}


# --------------------------------------------------------------------------
# Forward wrapper
# --------------------------------------------------------------------------
def q_net_forward(img, prep):
    """img: (B, 256, 4, 4) float32 NCHW. Returns (classes (B,40), code (B,4))."""
    B = img.shape[0]
    assert img.shape[1:] == (C_IN, KSIZE, KSIZE)

    x = img.reshape(B, K_FLAT)                 # f32; no pad / cast copy in HBM

    tb1, nt1 = _tiles_pass1(B)
    b_pad1 = tb1 * nt1

    cparams = pltpu.CompilerParams(
        dimension_semantics=("parallel",),
        vmem_limit_bytes=32 * 1024 * 1024,
    )

    # ---- pass 1: conv matmul (bf16 in-kernel) + masked partial BN stats -----
    h, stats = pl.pallas_call(
        functools.partial(_conv_stats_kernel, batch=B, tile=tb1),
        grid=(nt1,),
        in_specs=[
            pl.BlockSpec((tb1, K_FLAT), lambda i: (i, 0)),
            pl.BlockSpec((K_FLAT, C_MID), lambda i: (0, 0)),
        ],
        out_specs=(
            pl.BlockSpec((tb1, C_MID), lambda i: (i, 0)),
            pl.BlockSpec((None, 2, C_MID), lambda i: (i, 0, 0)),
        ),
        out_shape=(
            jax.ShapeDtypeStruct((b_pad1, C_MID), jnp.bfloat16),
            jax.ShapeDtypeStruct((nt1, 2, C_MID), jnp.float32),
        ),
        compiler_params=cparams,
    )(x, prep["w1_t"])

    # ---- pass 2: BN finalize + folded BN + LeakyReLU + fused heads ----------
    tb2, nt2 = _tiles_pass2(b_pad1)
    b_pad2 = tb2 * nt2

    out = pl.pallas_call(
        functools.partial(_bn_heads_kernel, batch=B),
        grid=(nt2,),
        in_specs=[
            pl.BlockSpec((tb2, C_MID), lambda i: (i, 0)),
            pl.BlockSpec((nt1, 2, C_MID), lambda i: (0, 0, 0)),
            pl.BlockSpec((2, C_MID), lambda i: (0, 0)),
            pl.BlockSpec((C_MID, HEAD_DIM), lambda i: (0, 0)),
            pl.BlockSpec((1, HEAD_DIM), lambda i: (0, 0)),
        ],
        out_specs=pl.BlockSpec((tb2, HEAD_DIM), lambda i: (i, 0)),
        out_shape=jax.ShapeDtypeStruct((b_pad2, HEAD_DIM), jnp.float32),
        compiler_params=cparams,
    )(h, stats, prep["bn"], prep["w_heads_t"], prep["b_heads"])

    classes = out[:B, :N_CLASSES]
    code = out[:B, N_CLASSES:N_CLASSES + CODE_DIM]
    return classes, code


# --------------------------------------------------------------------------
# Pure-JAX reference (mirrors the kernel's numerics: bf16 matmul operands,
# bf16 storage of h, f32 batch statistics) for an in-script sanity check.
# --------------------------------------------------------------------------
def _reference_forward(img, params):
    B = img.shape[0]
    x = img.reshape(B, -1).astype(jnp.bfloat16)
    w1 = params["w_conv"].reshape(C_MID, -1).astype(jnp.bfloat16)
    h = jax.lax.dot_general(x, w1, (((1,), (1,)), ((), ())),
                            preferred_element_type=jnp.float32)
    mean = jnp.mean(h, axis=0, keepdims=True)
    var = jnp.mean((h - mean) ** 2, axis=0, keepdims=True)     # biased, train mode
    h = h.astype(jnp.bfloat16).astype(jnp.float32)             # mirror bf16 h storage
    hn = (h - mean) * jax.lax.rsqrt(var + BN_EPS)
    hn = hn * params["bn_gamma"][None, :] + params["bn_beta"][None, :]
    a = jnp.where(hn >= 0, hn, LEAKY_SLOPE * hn).astype(jnp.bfloat16)
    wc = params["w_cls"].reshape(N_CLASSES, C_MID).astype(jnp.bfloat16)
    wz = params["w_code"].reshape(CODE_DIM, C_MID).astype(jnp.bfloat16)
    logits = jax.lax.dot_general(a, wc, (((1,), (1,)), ((), ())),
                                 preferred_element_type=jnp.float32)
    logits = logits + params["b_cls"][None, :]
    classes = jax.nn.softmax(logits, axis=-1)
    z = jax.lax.dot_general(a, wz, (((1,), (1,)), ((), ())),
                            preferred_element_type=jnp.float32)
    z = z + params["b_code"][None, :]
    return classes, jax.nn.sigmoid(z)


def init_params(key):
    ks = jax.random.split(key, 7)
    return {
        # PyTorch Conv2d weight layout: (Cout, Cin, Kh, Kw)
        "w_conv": 0.02 * jax.random.normal(ks[0], (C_MID, C_IN, KSIZE, KSIZE), jnp.float32),
        "bn_gamma": 1.0 + 0.1 * jax.random.normal(ks[1], (C_MID,), jnp.float32),
        "bn_beta": 0.1 * jax.random.normal(ks[2], (C_MID,), jnp.float32),
        "w_cls": 0.05 * jax.random.normal(ks[3], (N_CLASSES, C_MID, 1, 1), jnp.float32),
        "b_cls": 0.05 * jax.random.normal(ks[4], (N_CLASSES,), jnp.float32),
        "w_code": 0.05 * jax.random.normal(ks[5], (CODE_DIM, C_MID, 1, 1), jnp.float32),
        "b_code": 0.05 * jax.random.normal(ks[6], (CODE_DIM,), jnp.float32),
    }


if __name__ == "__main__":
    key = jax.random.PRNGKey(0)
    pkey, xkey = jax.random.split(key)
    params = init_params(pkey)
    prep = prepare_params(params)          # one-time weight prep, cached

    batch = 2
    img = jax.random.normal(xkey, (batch, C_IN, KSIZE, KSIZE), jnp.float32)

    fwd = jax.jit(q_net_forward)
    classes, code = jax.block_until_ready(fwd(img, prep))

    # sanity check against a pure-JAX reference with matching numerics
    ref_classes, ref_code = _reference_forward(img, params)
    assert classes.shape == (batch, N_CLASSES) and code.shape == (batch, CODE_DIM)
    assert bool(jnp.allclose(jnp.sum(classes, axis=-1), 1.0, atol=1e-3))
    assert bool(jnp.allclose(classes, ref_classes, atol=2e-3, rtol=2e-3))
    assert bool(jnp.allclose(code, ref_code, atol=2e-3, rtol=2e-3))

    print("KERNEL_OK")
</pallas_src>

<mosaic_0001>
module attributes {stable_mosaic.version = 11 : i64} {
  func.func @_conv_stats_kernel(%arg0: i32, %arg1: memref<2x4096xf32, #tpu.memory_space<vmem>>, %arg2: memref<4096x128xbf16, #tpu.memory_space<vmem>>, %arg3: memref<2x128xbf16, #tpu.memory_space<vmem>>, %arg4: memref<1x2x128xf32, #tpu.memory_space<vmem>>) attributes {dimension_semantics = [#tpu.dimension_semantics<parallel>], iteration_bounds = array<i64: 1>, scalar_prefetch = 0 : i64, scratch_operands = 0 : i64, tpu.core_type = #tpu.core_type<tc>, window_params = [{transform_indices = @transform_0, window_bounds = array<i64: 2, 4096>}, {pipeline_mode = #tpu.pipeline_mode<synchronous>, transform_indices = @transform_1, window_bounds = array<i64: 4096, 128>}, {transform_indices = @transform_2, window_bounds = array<i64: 2, 128>}, {transform_indices = @transform_3, window_bounds = array<i64: 1, 2, 128>}]} {
    %c0 = arith.constant 0 : index
    %c0_0 = arith.constant 0 : index
    %0 = vector.load %arg1[%c0, %c0_0] : memref<2x4096xf32, #tpu.memory_space<vmem>>, vector<2x4096xf32>
    %1 = arith.truncf %0 : vector<2x4096xf32> to vector<2x4096xbf16>
    %c0_1 = arith.constant 0 : index
    %c0_2 = arith.constant 0 : index
    %2 = vector.load %arg2[%c0_1, %c0_2] : memref<4096x128xbf16, #tpu.memory_space<vmem>>, vector<4096x128xbf16>
    %cst = arith.constant dense<0.000000e+00> : vector<2x128xf32>
    %3 = tpu.matmul %1, %2, %cst {dimension_numbers = #tpu.dot_dimension_numbers<[1], [0], [0], [1], [0, 0, 1, 1], [], []>} : vector<2x4096xbf16>, vector<4096x128xbf16>, vector<2x128xf32> -> vector<2x128xf32>
    %4 = arith.truncf %3 : vector<2x128xf32> to vector<2x128xbf16>
    %c0_3 = arith.constant 0 : index
    %c0_4 = arith.constant 0 : index
    %5 = vector.load %arg3[%c0_3, %c0_4] : memref<2x128xbf16, #tpu.memory_space<vmem>>, vector<2x128xbf16>
    tpu.vector_store %arg3[%c0_3, %c0_4], %4 {strides = array<i32>} : memref<2x128xbf16, #tpu.memory_space<vmem>>, vector<2x128xbf16>,
    %c2_i32 = arith.constant 2 : i32
    %6 = arith.muli %arg0, %c2_i32 : i32
    %7 = tpu.iota {dimensions = array<i32: 0>} : vector<2x1xi32>
    %8 = vector.broadcast %6 : i32 to vector<2x1xi32>
    %9 = arith.addi %8, %7 : vector<2x1xi32>
    %c2_i32_5 = arith.constant 2 : i32
    %10 = vector.broadcast %c2_i32_5 : i32 to vector<2x1xi32>
    %11 = arith.cmpi slt, %9, %10 : vector<2x1xi32>
    %cst_6 = arith.constant 0.000000e+00 : f32
    %12 = vector.shape_cast %11 : vector<2x1xi1> to vector<2x1xi1>
    %13 = vector.broadcast %12 : vector<2x1xi1> to vector<2x128xi1>
    %14 = vector.broadcast %cst_6 : f32 to vector<2x128xf32>
    %15 = arith.select %13, %3, %14 : vector<2x128xi1>, vector<2x128xf32>
    %cst_7 = arith.constant dense<0.000000e+00> : vector<128xf32>
    %16 = vector.multi_reduction <add>, %15, %cst_7 [0] : vector<2x128xf32> to vector<128xf32>
    %17 = vector.shape_cast %16 : vector<128xf32> to vector<1x128xf32>
    %c0_8 = arith.constant 0 : index
    %c0_9 = arith.constant 0 : index
    %c0_10 = arith.constant 0 : index
    %18 = vector.load %arg4[%c0_8, %c0_9, %c0_10] : memref<1x2x128xf32, #tpu.memory_space<vmem>>, vector<1x1x128xf32>
    %19 = vector.shape_cast %18 : vector<1x1x128xf32> to vector<1x128xf32>
    %20 = vector.shape_cast %17 : vector<1x128xf32> to vector<1x1x128xf32>
    tpu.vector_store %arg4[%c0_8, %c0_9, %c0_10], %20 {strides = array<i32>} : memref<1x2x128xf32, #tpu.memory_space<vmem>>, vector<1x1x128xf32>,
    %21 = arith.mulf %15, %15 : vector<2x128xf32>
    %cst_11 = arith.constant dense<0.000000e+00> : vector<128xf32>
    %22 = vector.multi_reduction <add>, %21, %cst_11 [0] : vector<2x128xf32> to vector<128xf32>
    %23 = vector.shape_cast %22 : vector<128xf32> to vector<1x128xf32>
    %c0_12 = arith.constant 0 : index
    %c1 = arith.constant 1 : index
    %c0_13 = arith.constant 0 : index
    %24 = vector.load %arg4[%c0_12, %c1, %c0_13] : memref<1x2x128xf32, #tpu.memory_space<vmem>>, vector<1x1x128xf32>
    %25 = vector.shape_cast %24 : vector<1x1x128xf32> to vector<1x128xf32>
    %26 = vector.shape_cast %23 : vector<1x128xf32> to vector<1x1x128xf32>
    tpu.vector_store %arg4[%c0_12, %c1, %c0_13], %26 {strides = array<i32>} : memref<1x2x128xf32, #tpu.memory_space<vmem>>, vector<1x1x128xf32>,
    return
  }
  func.func @transform_0(%arg0: i32) -> (i32, i32) {
    %c0_i32 = arith.constant 0 : i32
    %c0_i32_0 = arith.constant 0 : i32
    return %arg0, %c0_i32 : i32, i32
  }
  func.func @transform_1(%arg0: i32) -> (i32, i32) {
    %c0_i32 = arith.constant 0 : i32
    %c0_i32_0 = arith.constant 0 : i32
    %c0_i32_1 = arith.constant 0 : i32
    return %c0_i32, %c0_i32_0 : i32, i32
  }
  func.func @transform_2(%arg0: i32) -> (i32, i32) {
    %c0_i32 = arith.constant 0 : i32
    %c0_i32_0 = arith.constant 0 : i32
    return %arg0, %c0_i32 : i32, i32
  }
  func.func @transform_3(%arg0: i32) -> (i32, i32, i32) {
    %c0_i32 = arith.constant 0 : i32
    %c0_i32_0 = arith.constant 0 : i32
    %c0_i32_1 = arith.constant 0 : i32
    return %arg0, %c0_i32, %c0_i32_0 : i32, i32, i32
  }
}

module attributes {stable_mosaic.version = 11 : i64} {
  func.func @_bn_heads_kernel(%arg0: i32, %arg1: memref<2x128xbf16, #tpu.memory_space<vmem>>, %arg2: memref<1x2x128xf32, #tpu.memory_space<vmem>>, %arg3: memref<2x128xf32, #tpu.memory_space<vmem>>, %arg4: memref<128x128xbf16, #tpu.memory_space<vmem>>, %arg5: memref<1x128xf32, #tpu.memory_space<vmem>>, %arg6: memref<2x128xf32, #tpu.memory_space<vmem>>) attributes {dimension_semantics = [#tpu.dimension_semantics<parallel>], iteration_bounds = array<i64: 1>, scalar_prefetch = 0 : i64, scratch_operands = 0 : i64, tpu.core_type = #tpu.core_type<tc>, window_params = [{transform_indices = @transform_0, window_bounds = array<i64: 2, 128>}, {pipeline_mode = #tpu.pipeline_mode<synchronous>, transform_indices = @transform_1, window_bounds = array<i64: 1, 2, 128>}, {pipeline_mode = #tpu.pipeline_mode<synchronous>, transform_indices = @transform_2, window_bounds = array<i64: 2, 128>}, {pipeline_mode = #tpu.pipeline_mode<synchronous>, transform_indices = @transform_3, window_bounds = array<i64: 128, 128>}, {pipeline_mode = #tpu.pipeline_mode<synchronous>, transform_indices = @transform_4, window_bounds = array<i64: 1, 128>}, {transform_indices = @transform_5, window_bounds = array<i64: 2, 128>}]} {
    %c0 = arith.constant 0 : index
    %c0_0 = arith.constant 0 : index
    %c0_1 = arith.constant 0 : index
    %0 = vector.load %arg2[%c0, %c0_0, %c0_1] : memref<1x2x128xf32, #tpu.memory_space<vmem>>, vector<1x2x128xf32>
    %cst = arith.constant dense<0.000000e+00> : vector<2x128xf32>
    %1 = vector.multi_reduction <add>, %0, %cst [0] : vector<1x2x128xf32> to vector<2x128xf32>
    %2 = vector.extract_strided_slice %1 {offsets = [0, 0], sizes = [1, 128], strides = [1, 1]} : vector<2x128xf32> to vector<1x128xf32>
    %cst_2 = arith.constant 5.000000e-01 : f32
    %3 = vector.broadcast %cst_2 : f32 to vector<1x128xf32>
    %4 = arith.mulf %2, %3 : vector<1x128xf32>
    %5 = vector.extract_strided_slice %1 {offsets = [1, 0], sizes = [1, 128], strides = [1, 1]} : vector<2x128xf32> to vector<1x128xf32>
    %cst_3 = arith.constant 5.000000e-01 : f32
    %6 = vector.broadcast %cst_3 : f32 to vector<1x128xf32>
    %7 = arith.mulf %5, %6 : vector<1x128xf32>
    %8 = arith.mulf %4, %4 : vector<1x128xf32>
    %9 = arith.subf %7, %8 : vector<1x128xf32>
    %cst_4 = arith.constant 0.000000e+00 : f32
    %10 = vector.broadcast %cst_4 : f32 to vector<1x128xf32>
    %11 = arith.maximumf %9, %10 : vector<1x128xf32>
    %cst_5 = arith.constant 9.99999974E-6 : f32
    %12 = vector.broadcast %cst_5 : f32 to vector<1x128xf32>
    %13 = arith.addf %11, %12 : vector<1x128xf32>
    %14 = math.rsqrt %13 : vector<1x128xf32>
    %c0_6 = arith.constant 0 : index
    %c0_7 = arith.constant 0 : index
    %15 = vector.load %arg3[%c0_6, %c0_7] : memref<2x128xf32, #tpu.memory_space<vmem>>, vector<1x128xf32>
    %16 = arith.mulf %15, %14 : vector<1x128xf32>
    %c1 = arith.constant 1 : index
    %c0_8 = arith.constant 0 : index
    %17 = vector.load %arg3[%c1, %c0_8] : memref<2x128xf32, #tpu.memory_space<vmem>>, vector<1x128xf32>
    %18 = arith.mulf %4, %16 : vector<1x128xf32>
    %19 = arith.subf %17, %18 : vector<1x128xf32>
    %c0_9 = arith.constant 0 : index
    %c0_10 = arith.constant 0 : index
    %20 = vector.load %arg1[%c0_9, %c0_10] : memref<2x128xbf16, #tpu.memory_space<vmem>>, vector<2x128xbf16>
    %21 = arith.extf %20 : vector<2x128xbf16> to vector<2x128xf32>
    %22 = vector.broadcast %16 : vector<1x128xf32> to vector<2x128xf32>
    %23 = arith.mulf %21, %22 : vector<2x128xf32>
    %24 = vector.broadcast %19 : vector<1x128xf32> to vector<2x128xf32>
    %25 = arith.addf %23, %24 : vector<2x128xf32>
    %cst_11 = arith.constant 0.000000e+00 : f32
    %26 = vector.broadcast %cst_11 : f32 to vector<2x128xf32>
    %27 = arith.cmpf oge, %25, %26 : vector<2x128xf32>
    %cst_12 = arith.constant 1.000000e-01 : f32
    %28 = vector.broadcast %cst_12 : f32 to vector<2x128xf32>
    %29 = arith.mulf %28, %25 : vector<2x128xf32>
    %30 = arith.select %27, %25, %29 : vector<2x128xi1>, vector<2x128xf32>
    %31 = arith.truncf %30 : vector<2x128xf32> to vector<2x128xbf16>
    %c0_13 = arith.constant 0 : index
    %c0_14 = arith.constant 0 : index
    %32 = vector.load %arg4[%c0_13, %c0_14] : memref<128x128xbf16, #tpu.memory_space<vmem>>, vector<128x128xbf16>
    %cst_15 = arith.constant dense<0.000000e+00> : vector<2x128xf32>
    %33 = tpu.matmul %31, %32, %cst_15 {dimension_numbers = #tpu.dot_dimension_numbers<[1], [0], [0], [1], [0, 0, 1, 1], [], []>} : vector<2x128xbf16>, vector<128x128xbf16>, vector<2x128xf32> -> vector<2x128xf32>
    %c0_16 = arith.constant 0 : index
    %c0_17 = arith.constant 0 : index
    %34 = vector.load %arg5[%c0_16, %c0_17] : memref<1x128xf32, #tpu.memory_space<vmem>>, vector<1x128xf32>
    %35 = vector.broadcast %34 : vector<1x128xf32> to vector<2x128xf32>
    %36 = arith.addf %33, %35 : vector<2x128xf32>
    %37 = tpu.iota {dimensions = array<i32: 1>} : vector<2x128xi32>
    %c40_i32 = arith.constant 40 : i32
    %38 = vector.broadcast %c40_i32 : i32 to vector<2x128xi32>
    %39 = arith.cmpi slt, %37, %38 : vector<2x128xi32>
    %cst_18 = arith.constant -1.000000e+30 : f32
    %40 = vector.broadcast %cst_18 : f32 to vector<2x128xf32>
    %41 = arith.select %39, %36, %40 : vector<2x128xi1>, vector<2x128xf32>
    %cst_19 = arith.constant dense<0xFF800000> : vector<2xf32>
    %42 = vector.multi_reduction <maximumf>, %41, %cst_19 [1] : vector<2x128xf32> to vector<2xf32>
    %43 = vector.shape_cast %42 : vector<2xf32> to vector<2x1xf32>
    %44 = vector.broadcast %43 : vector<2x1xf32> to vector<2x128xf32>
    %45 = arith.subf %41, %44 : vector<2x128xf32>
    %46 = math.exp %45 : vector<2x128xf32>
    %cst_20 = arith.constant dense<0.000000e+00> : vector<2xf32>
    %47 = vector.multi_reduction <add>, %46, %cst_20 [1] : vector<2x128xf32> to vector<2xf32>
    %48 = vector.shape_cast %47 : vector<2xf32> to vector<2x1xf32>
    %49 = vector.broadcast %48 : vector<2x1xf32> to vector<2x128xf32>
    %50 = arith.divf %46, %49 : vector<2x128xf32>
    %cst_21 = arith.constant 0.000000e+00 : f32
    %51 = vector.broadcast %cst_21 : f32 to vector<2x128xf32>
    %52 = arith.subf %51, %36 : vector<2x128xf32>
    %53 = math.exp %52 : vector<2x128xf32>
    %cst_22 = arith.constant 1.000000e+00 : f32
    %54 = vector.broadcast %cst_22 : f32 to vector<2x128xf32>
    %55 = arith.addf %54, %53 : vector<2x128xf32>
    %cst_23 = arith.constant 1.000000e+00 : f32
    %56 = vector.broadcast %cst_23 : f32 to vector<2x128xf32>
    %57 = arith.divf %56, %55 : vector<2x128xf32>
    %58 = arith.select %39, %50, %57 : vector<2x128xi1>, vector<2x128xf32>
    %c0_24 = arith.constant 0 : index
    %c0_25 = arith.constant 0 : index
    %59 = vector.load %arg6[%c0_24, %c0_25] : memref<2x128xf32, #tpu.memory_space<vmem>>, vector<2x128xf32>
    tpu.vector_store %arg6[%c0_24, %c0_25], %58 {strides = array<i32>} : memref<2x128xf32, #tpu.memory_space<vmem>>, vector<2x128xf32>,
    return
  }
  func.func @transform_0(%arg0: i32) -> (i32, i32) {
    %c0_i32 = arith.constant 0 : i32
    %c0_i32_0 = arith.constant 0 : i32
    return %arg0, %c0_i32 : i32, i32
  }
  func.func @transform_1(%arg0: i32) -> (i32, i32, i32) {
    %c0_i32 = arith.constant 0 : i32
    %c0_i32_0 = arith.constant 0 : i32
    %c0_i32_1 = arith.constant 0 : i32
    %c0_i32_2 = arith.constant 0 : i32
    return %c0_i32, %c0_i32_0, %c0_i32_1 : i32, i32, i32
  }
  func.func @transform_2(%arg0: i32) -> (i32, i32) {
    %c0_i32 = arith.constant 0 : i32
    %c0_i32_0 = arith.constant 0 : i32
    %c0_i32_1 = arith.constant 0 : i32
    return %c0_i32, %c0_i32_0 : i32, i32
  }
  func.func @transform_3(%arg0: i32) -> (i32, i32) {
    %c0_i32 = arith.constant 0 : i32
    %c0_i32_0 = arith.constant 0 : i32
    %c0_i32_1 = arith.constant 0 : i32
    return %c0_i32, %c0_i32_0 : i32, i32
  }
  func.func @transform_4(%arg0: i32) -> (i32, i32) {
    %c0_i32 = arith.constant 0 : i32
    %c0_i32_0 = arith.constant 0 : i32
    %c0_i32_1 = arith.constant 0 : i32
    return %c0_i32, %c0_i32_0 : i32, i32
  }
  func.func @transform_5(%arg0: i32) -> (i32, i32) {
    %c0_i32 = arith.constant 0 : i32
    %c0_i32_0 = arith.constant 0 : i32
    return %arg0, %c0_i32 : i32, i32
  }
}

</mosaic_0001>

<llo_original>
// kernel: q_net_forward.3
$region0: #{q_net_forward.3}
  #allocation0 [shape = 'u32[]', space=smem, size = 0x4, offset = 0x4, fixed_abs, tag = 'smem constant byte address 0x4 - core index']
  #allocation1 [shape = 'u32[144,128]{1,0:T(1,128)}', space=vmem, size = 0x12000, scoped, tag = 'internal scratch']
  %s0 = inlined_call_operand.vmem [shape: bf16[2,128], index: 0, kind: input, shape index: {}]
  %s1 = inlined_call_operand.vmem [shape: f32[1,2,128], index: 1, kind: input, shape index: {}]
  %s2 = inlined_call_operand.vmem [shape: f32[2,128], index: 2, kind: input, shape index: {}]
  %s3 = inlined_call_operand.vmem [shape: bf16[128,128], index: 3, kind: input, shape index: {}]
  %s4 = inlined_call_operand.vmem [shape: f32[1,128], index: 4, kind: input, shape index: {}]
  %s5 = inlined_call_operand.vmem [shape: f32[2,128], index: 5, kind: output, shape index: {}]
  %s6 = sld [smem:[#allocation0]]
  $region30: #{q_net_forward.3} parent=0
    _
  %s8 = ssub.s32 1, %s6
  %s9 = scalar_select 0, %s8, %s6
  // Predicated region
  $region2: #{q_net_forward.3} parent=0 // pred_check
    _
  $region3: #{q_net_forward.3} parent=0 // pred_check_branch
    %11 = sbr.rel (0) target = $region5
  $region4: #{q_net_forward.3} parent=0 // pred_region
    _
  $region5: #{q_net_forward.3} parent=0 // pred_fallthru
    _
  // Predicated region
  $region6: #{q_net_forward.3} parent=0 // pred_check
    _
  $region7: #{q_net_forward.3} parent=0 // pred_check_branch
    %13 = sbr.rel (0) target = $region9
  $region8: #{q_net_forward.3} parent=0 // pred_region
    _
  $region9: #{q_net_forward.3} parent=0 // pred_fallthru
    _
  // Predicated region
  $region10: #{q_net_forward.3} parent=0 // pred_check
    _
  $region11: #{q_net_forward.3} parent=0 // pred_check_branch
    %15 = sbr.rel (0) target = $region13
  $region12: #{q_net_forward.3} parent=0 // pred_region
    _
  $region13: #{q_net_forward.3} parent=0 // pred_fallthru
    _
  // Predicated region
  $region14: #{q_net_forward.3} parent=0 // pred_check
    _
  $region15: #{q_net_forward.3} parent=0 // pred_check_branch
    %17 = sbr.rel (0) target = $region17
  $region16: #{q_net_forward.3} parent=0 // pred_region
    _
  $region17: #{q_net_forward.3} parent=0 // pred_fallthru
    _
  // Predicated region
  $region18: #{q_net_forward.3} parent=0 // pred_check
    _
  $region19: #{q_net_forward.3} parent=0 // pred_check_branch
    %19 = sbr.rel (0) target = $region21
  $region20: #{q_net_forward.3} parent=0 // pred_region
    _
  $region21: #{q_net_forward.3} parent=0 // pred_fallthru
    _
  %v21 = vld [vmem:[%s1] sm:$0x3]
  %v22 = vadd.f32 %v21, 0.0
  %v23 = vmul.f32 %v22, 0.5
  %v24 = vmul.f32 %v23, %v23
  %v26 = vrot.slane %v24, 7
  %v28 = vsub.f32 %v23, %v26
  %v29 = vmax.f32 %v28, 0.0
  %v30 = vadd.f32 %v29, 1e-05
  %v31 = vrsqrt.pop %v30
  %v32 = vld [vmem:[%s2] sm:$0x1]
  %v34 = vrot.slane %v31, 1
  %v36 = vmul.f32 %v32, %v34
  %v37 = vld [vmem:[%s2 + $0x1] sm:$0x1]
  %v38 = vmul.f32 %v23, %v36
  %v39 = vsub.f32 %v37, %v38
  %v40 = vld [vmem:[%s0] sm:$0x1]
  %v41 = vunpack.c.l.bf16 %v40
  %v42 = vlaneseq
  %v43 = vshrl.u32 %v42, 7
  %v44 = vsub.s32 0, %v43
  %v45 = vrot.slane %v36, %v44
  %v46 = vmul.f32 %v41, %v45
  %v47 = vlaneseq
  %v48 = vshrl.u32 %v47, 7
  %v49 = vsub.s32 0, %v48
  %v50 = vrot.slane %v39, %v49
  %v51 = vadd.f32 %v46, %v50
  %vm52 = vcmp.ge.f32.partialorder %v51, 0.0
  %v53 = vmul.f32 %v51, 0.1
  %v54 = vsel %vm52, %v51, %v53
  %v55 = vpack.c.bf16 %v54, %v54
  %v56 = vld [vmem:[%s3] sm:$0xf]
  %v57 = vld [vmem:[%s3 + $0x4] sm:$0xf]
  %v58 = vld [vmem:[%s3 + $0x8] sm:$0xf]
  %v59 = vld [vmem:[%s3 + $0xc] sm:$0xf]
  %v60 = vld [vmem:[%s3 + $0x10] sm:$0xf]
  %v61 = vld [vmem:[%s3 + $0x14] sm:$0xf]
  %v62 = vld [vmem:[%s3 + $0x18] sm:$0xf]
  %v63 = vld [vmem:[%s3 + $0x1c] sm:$0xf]
  %v64 = vld [vmem:[%s3 + $0x20] sm:$0xf]
  %v65 = vld [vmem:[%s3 + $0x24] sm:$0xf]
  %v66 = vld [vmem:[%s3 + $0x28] sm:$0xf]
  %v67 = vld [vmem:[%s3 + $0x2c] sm:$0xf]
  %v68 = vld [vmem:[%s3 + $0x30] sm:$0xf]
  %v69 = vld [vmem:[%s3 + $0x34] sm:$0xf]
  %v70 = vld [vmem:[%s3 + $0x38] sm:$0xf]
  %v71 = vld [vmem:[%s3 + $0x3c] sm:$0xf]
  %v72 = vld [vmem:[%s4] sm:$0x1]
  %v74 = vlaneseq
  %v75 = vshrl.u32 %v74, 7
  %v76 = vsub.s32 0, %v75
  %v77 = vrot.slane %v72, %v76
  %v95 = vunpack.c.l.b16 %v56
  %v96 = vunpack.c.l.b16 %v57
  %v97 = vunpack.c.l.b16 %v58
  %v98 = vunpack.c.l.b16 %v59
  %v99 = vunpack.c.l.b16 %v60
  %v100 = vunpack.c.l.b16 %v61
  %v101 = vunpack.c.l.b16 %v62
  %v102 = vunpack.c.l.b16 %v63
  %v103 = vunpack.c.l.b16 %v64
  %v104 = vunpack.c.l.b16 %v65
  %v105 = vunpack.c.l.b16 %v66
  %v106 = vunpack.c.l.b16 %v67
  %v107 = vunpack.c.l.b16 %v68
  %v108 = vunpack.c.l.b16 %v69
  %v109 = vunpack.c.l.b16 %v70
  %v110 = vunpack.c.l.b16 %v71
  %v111 = vpack.c.b16 %v96, %v95
  %v112 = vpack.c.b16 %v98, %v97
  %v113 = vpack.c.b16 %v100, %v99
  %v114 = vpack.c.b16 %v102, %v101
  %v115 = vpack.c.b16 %v104, %v103
  %v116 = vpack.c.b16 %v106, %v105
  %v117 = vpack.c.b16 %v108, %v107
  %v118 = vpack.c.b16 %v110, %v109
  %127 = vmatprep.subr.bf16.mxu0 0
  %128 = vmatpush1.bf16.msra.mxu0 %v118
  %129 = vmatprep.subr.bf16.mxu0 0
  %130 = vmatpush1.bf16.msra.mxu0 %v117
  %131 = vmatprep.subr.bf16.mxu0 0
  %132 = vmatpush1.bf16.msra.mxu0 %v116
  %133 = vmatprep.subr.bf16.mxu0 0
  %134 = vmatpush1.bf16.msra.mxu0 %v115
  %135 = vmatprep.subr.bf16.mxu0 0
  %136 = vmatpush1.bf16.msra.mxu0 %v114
  %137 = vmatprep.subr.bf16.mxu0 0
  %138 = vmatpush1.bf16.msra.mxu0 %v113
  %139 = vmatprep.subr.bf16.mxu0 0
  %140 = vmatpush1.bf16.msra.mxu0 %v112
  %141 = vmatprep.subr.bf16.mxu0 0
  %142 = vmatpush1.bf16.msra.mxu0 %v111
  %143 = vmatprep.subr.bf16.mxu0 0
  %144 = vmatpush2.bf16.msra.mxu0 0
  %145 = vmatprep.subr.bf16.mxu0 0
  %146 = vmatpush2.bf16.msra.mxu0 0
  %147 = vmatprep.subr.bf16.mxu0 0
  %148 = vmatpush2.bf16.msra.mxu0 0
  %149 = vmatprep.subr.bf16.mxu0 0
  %150 = vmatpush2.bf16.msra.mxu0 0
  %151 = vmatprep.subr.bf16.mxu0 0
  %152 = vmatpush2.bf16.msra.mxu0 0
  %153 = vmatprep.subr.bf16.mxu0 0
  %154 = vmatpush2.bf16.msra.mxu0 0
  %155 = vmatprep.subr.bf16.mxu0 0
  %156 = vmatpush2.bf16.msra.mxu0 0
  %157 = vmatprep.subr.bf16.mxu0 0
  %158 = vmatpush2.bf16.msra.mxu0 0
  %159 = vmatprep.mubr.bf16.mxu0 0
  %160 = vmatmul.mubr.bf16.gmra.mxu0 %v55
  %v161 = vpop.f32.mrf.mxu0
  %v162 = vadd.f32 %v77, %v161
  %v163 = vpop.f32.mrf.mxu0
  %v164 = vpop.f32.mrf.mxu0
  %v165 = vpop.f32.mrf.mxu0
  %166 = vdwg.mxu0
  %v167 = vlaneseq
  %v168 = vand.u32 %v167, 127
  %vm169 = vcmp.lt.s32.totalorder %v168, 40
  %v170 = vsel %vm169, %v162, -1e+30
  %vm171 = vcmask 1041408
  %v172 = vsel %vm171, %v170, -inf
  %173 = vmax.xlane.f32.xlu0 %v172
  %v174 = vpop.xlane.xlu0 %173
  %v175 = vsub.f32 %v170, %v174
  %v176 = vmul.f32 %v175, 1.442695
  %v177 = vpow.pop %v176
  %v178 = vsel %vm171, %v177, 0.0
  %179 = vadd.xlane.f32.xlu0 %v178
  %v180 = vpop.xlane.xlu0 %179
  %v181 = vrcp.pop %v180
  %v182 = vmul.f32 %v177, %v181
  %v183 = vsub.f32 0.0, %v162
  %v184 = vmul.f32 %v183, 1.442695
  %v185 = vpow.pop %v184
  %v186 = vadd.f32 %v185, 1.0
  %v187 = vrcp.pop %v186
  %v188 = vmul.f32 1.0, %v187
  %v189 = vsel %vm169, %v182, %v188
  %190 = vst [vmem:[%s5] sm:$0x3] %v189
  // Predicated region
  $region22: #{q_net_forward.3} parent=0 // pred_check
    _
  $region23: #{q_net_forward.3} parent=0 // pred_check_branch
    %192 = sbr.rel (0) target = $region25
  $region24: #{q_net_forward.3} parent=0 // pred_region
    _
  $region25: #{q_net_forward.3} parent=0 // pred_fallthru
    _
  // Predicated region
  $region26: #{q_net_forward.3} parent=0 // pred_check
    _
  $region27: #{q_net_forward.3} parent=0 // pred_check_branch
    %194 = sbr.rel (0) target = $region29
  $region28: #{q_net_forward.3} parent=0 // pred_region
    _
  $region29: #{q_net_forward.3} parent=0 // pred_fallthru
    _

// kernel: q_net_forward.2
$region0: #{q_net_forward.2}
  #allocation0 [shape = 'u32[]', space=smem, size = 0x4, offset = 0x4, fixed_abs, tag = 'smem constant byte address 0x4 - core index']
  #allocation1 [shape = 'u32[144,128]{1,0:T(1,128)}', space=vmem, size = 0x12000, scoped, tag = 'internal scratch']
  %s0 = inlined_call_operand.vmem [shape: f32[2,4096], index: 0, kind: input, shape index: {}]
  %s1 = inlined_call_operand.vmem [shape: bf16[4096,128], index: 1, kind: input, shape index: {}]
  %s2 = inlined_call_operand.vmem [shape: bf16[2,128], index: 2, kind: output, shape index: {0}]
  %s3 = inlined_call_operand.vmem [shape: f32[1,2,128], index: 3, kind: output, shape index: {1}]
  %4 = xla_tuple %s2, %s3
  %s5 = sld [smem:[#allocation0]]
  $region26: #{q_net_forward.2} parent=0
    _
  %s7 = ssub.s32 1, %s5
  %s8 = scalar_select 0, %s7, %s5
  // Predicated region
  $region2: #{q_net_forward.2} parent=0 // pred_check
    _
  $region3: #{q_net_forward.2} parent=0 // pred_check_branch
    %10 = sbr.rel (0) target = $region5
  $region4: #{q_net_forward.2} parent=0 // pred_region
    _
  $region5: #{q_net_forward.2} parent=0 // pred_fallthru
    _
  // Predicated region
  $region6: #{q_net_forward.2} parent=0 // pred_check
    _
  $region7: #{q_net_forward.2} parent=0 // pred_check_branch
    %12 = sbr.rel (0) target = $region9
  $region8: #{q_net_forward.2} parent=0 // pred_region
    _
  $region9: #{q_net_forward.2} parent=0 // pred_fallthru
    _
  %v14 = vld [vmem:[%s0] sm:$0xff]
  %v15 = vld [vmem:[%s0 + $0x8] sm:$0xff]
  %v16 = vld [vmem:[%s0 + $0x10] sm:$0xff]
  %v17 = vld [vmem:[%s0 + $0x18] sm:$0xff]
  %v18 = vld [vmem:[%s0 + $0x20] sm:$0xff]
  %v19 = vld [vmem:[%s0 + $0x28] sm:$0xff]
  %v20 = vld [vmem:[%s0 + $0x30] sm:$0xff]
  %v21 = vld [vmem:[%s0 + $0x38] sm:$0xff]
  %v30 = vcombine.high %v14, %v14
  %v32 = vunpack.c.l.s4 1983009808
  %v33 = vunpack.c.0.s8 %v32
  %v34 = vlaneseq
  %v35 = vshrl.u32 %v34, 7
  %v36 = vsub.s32 %v33, %v35
  %v37 = vrot.slane %v14, %v36
  %v39 = vunpack.c.l.s4 1983009808
  %v40 = vunpack.c.0.s8 %v39
  %v41 = vlaneseq
  %v42 = vshrl.u32 %v41, 7
  %v43 = vsub.s32 %v40, %v42
  %v44 = vrot.slane %v30, %v43
  %v45 = vcombine.high %v37, %v37
  %v46 = vcombine.high %v44, %v44
  %v47 = vcombine.high %v15, %v15
  %v49 = vunpack.c.l.s4 1983009808
  %v50 = vunpack.c.0.s8 %v49
  %v51 = vlaneseq
  %v52 = vshrl.u32 %v51, 7
  %v53 = vsub.s32 %v50, %v52
  %v54 = vrot.slane %v15, %v53
  %v56 = vunpack.c.l.s4 1983009808
  %v57 = vunpack.c.0.s8 %v56
  %v58 = vlaneseq
  %v59 = vshrl.u32 %v58, 7
  %v60 = vsub.s32 %v57, %v59
  %v61 = vrot.slane %v47, %v60
  %v62 = vcombine.high %v54, %v54
  %v63 = vcombine.high %v61, %v61
  %v64 = vcombine.high %v16, %v16
  %v66 = vunpack.c.l.s4 1983009808
  %v67 = vunpack.c.0.s8 %v66
  %v68 = vlaneseq
  %v69 = vshrl.u32 %v68, 7
  %v70 = vsub.s32 %v67, %v69
  %v71 = vrot.slane %v16, %v70
  %v73 = vunpack.c.l.s4 1983009808
  %v74 = vunpack.c.0.s8 %v73
  %v75 = vlaneseq
  %v76 = vshrl.u32 %v75, 7
  %v77 = vsub.s32 %v74, %v76
  %v78 = vrot.slane %v64, %v77
  %v79 = vcombine.high %v71, %v71
  %v80 = vcombine.high %v78, %v78
  %v81 = vcombine.high %v17, %v17
  %v83 = vunpack.c.l.s4 1983009808
  %v84 = vunpack.c.0.s8 %v83
  %v85 = vlaneseq
  %v86 = vshrl.u32 %v85, 7
  %v87 = vsub.s32 %v84, %v86
  %v88 = vrot.slane %v17, %v87
  %v90 = vunpack.c.l.s4 1983009808
  %v91 = vunpack.c.0.s8 %v90
  %v92 = vlaneseq
  %v93 = vshrl.u32 %v92, 7
  %v94 = vsub.s32 %v91, %v93
  %v95 = vrot.slane %v81, %v94
  %v96 = vcombine.high %v88, %v88
  %v97 = vcombine.high %v95, %v95
  %v98 = vcombine.high %v18, %v18
  %v100 = vunpack.c.l.s4 1983009808
  %v101 = vunpack.c.0.s8 %v100
  %v102 = vlaneseq
  %v103 = vshrl.u32 %v102, 7
  %v104 = vsub.s32 %v101, %v103
  %v105 = vrot.slane %v18, %v104
  %v107 = vunpack.c.l.s4 1983009808
  %v108 = vunpack.c.0.s8 %v107
  %v109 = vlaneseq
  %v110 = vshrl.u32 %v109, 7
  %v111 = vsub.s32 %v108, %v110
  %v112 = vrot.slane %v98, %v111
  %v113 = vcombine.high %v105, %v105
  %v114 = vcombine.high %v112, %v112
  %v115 = vcombine.high %v19, %v19
  %v117 = vunpack.c.l.s4 1983009808
  %v118 = vunpack.c.0.s8 %v117
  %v119 = vlaneseq
  %v120 = vshrl.u32 %v119, 7
  %v121 = vsub.s32 %v118, %v120
  %v122 = vrot.slane %v19, %v121
  %v124 = vunpack.c.l.s4 1983009808
  %v125 = vunpack.c.0.s8 %v124
  %v126 = vlaneseq
  %v127 = vshrl.u32 %v126, 7
  %v128 = vsub.s32 %v125, %v127
  %v129 = vrot.slane %v115, %v128
  %v130 = vcombine.high %v122, %v122
  %v131 = vcombine.high %v129, %v129
  %v132 = vcombine.high %v20, %v20
  %v134 = vunpack.c.l.s4 1983009808
  %v135 = vunpack.c.0.s8 %v134
  %v136 = vlaneseq
  %v137 = vshrl.u32 %v136, 7
  %v138 = vsub.s32 %v135, %v137
  %v139 = vrot.slane %v20, %v138
  %v141 = vunpack.c.l.s4 1983009808
  %v142 = vunpack.c.0.s8 %v141
  %v143 = vlaneseq
  %v144 = vshrl.u32 %v143, 7
  %v145 = vsub.s32 %v142, %v144
  %v146 = vrot.slane %v132, %v145
  %v147 = vcombine.high %v139, %v139
  %v148 = vcombine.high %v146, %v146
  %v149 = vcombine.high %v21, %v21
  %v151 = vunpack.c.l.s4 1983009808
  %v152 = vunpack.c.0.s8 %v151
  %v153 = vlaneseq
  %v154 = vshrl.u32 %v153, 7
  %v155 = vsub.s32 %v152, %v154
  %v156 = vrot.slane %v21, %v155
  %v158 = vunpack.c.l.s4 1983009808
  %v159 = vunpack.c.0.s8 %v158
  %v160 = vlaneseq
  %v161 = vshrl.u32 %v160, 7
  %v162 = vsub.s32 %v159, %v161
  %v163 = vrot.slane %v149, %v162
  %v164 = vcombine.high %v156, %v156
  %v165 = vcombine.high %v163, %v163
  %v198 = vpack.c.bf16 %v37, %v37
  %v199 = vpack.c.bf16 %v45, %v45
  %v200 = vpack.c.bf16 %v44, %v44
  %v201 = vpack.c.bf16 %v46, %v46
  %v202 = vpack.c.bf16 %v54, %v54
  %v203 = vpack.c.bf16 %v62, %v62
  %v204 = vpack.c.bf16 %v61, %v61
  %v205 = vpack.c.bf16 %v63, %v63
  %v206 = vpack.c.bf16 %v71, %v71
  %v207 = vpack.c.bf16 %v79, %v79
  %v208 = vpack.c.bf16 %v78, %v78
  %v209 = vpack.c.bf16 %v80, %v80
  %v210 = vpack.c.bf16 %v88, %v88
  %v211 = vpack.c.bf16 %v96, %v96
  %v212 = vpack.c.bf16 %v95, %v95
  %v213 = vpack.c.bf16 %v97, %v97
  %v214 = vpack.c.bf16 %v105, %v105
  %v215 = vpack.c.bf16 %v113, %v113
  %v216 = vpack.c.bf16 %v112, %v112
  %v217 = vpack.c.bf16 %v114, %v114
  %v218 = vpack.c.bf16 %v122, %v122
  %v219 = vpack.c.bf16 %v130, %v130
  %v220 = vpack.c.bf16 %v129, %v129
  %v221 = vpack.c.bf16 %v131, %v131
  %v222 = vpack.c.bf16 %v139, %v139
  %v223 = vpack.c.bf16 %v147, %v147
  %v224 = vpack.c.bf16 %v146, %v146
  %v225 = vpack.c.bf16 %v148, %v148
  %v226 = vpack.c.bf16 %v156, %v156
  %v227 = vpack.c.bf16 %v164, %v164
  %v228 = vpack.c.bf16 %v163, %v163
  %v229 = vpack.c.bf16 %v165, %v165
  %v230 = vld [vmem:[%s1] sm:$0xf]
  %v231 = vld [vmem:[%s1 + $0x4] sm:$0xf]
  %v232 = vld [vmem:[%s1 + $0x8] sm:$0xf]
  %v233 = vld [vmem:[%s1 + $0xc] sm:$0xf]
  %v234 = vld [vmem:[%s1 + $0x10] sm:$0xf]
  %v235 = vld [vmem:[%s1 + $0x14] sm:$0xf]
  %v236 = vld [vmem:[%s1 + $0x18] sm:$0xf]
  %v237 = vld [vmem:[%s1 + $0x1c] sm:$0xf]
  %v238 = vld [vmem:[%s1 + $0x20] sm:$0xf]
  %v239 = vld [vmem:[%s1 + $0x24] sm:$0xf]
  %v240 = vld [vmem:[%s1 + $0x28] sm:$0xf]
  %v241 = vld [vmem:[%s1 + $0x2c] sm:$0xf]
  %v242 = vld [vmem:[%s1 + $0x30] sm:$0xf]
  %v243 = vld [vmem:[%s1 + $0x34] sm:$0xf]
  %v244 = vld [vmem:[%s1 + $0x38] sm:$0xf]
  %v245 = vld [vmem:[%s1 + $0x3c] sm:$0xf]
  %v246 = vld [vmem:[%s1 + $0x40] sm:$0xf]
  %v247 = vld [vmem:[%s1 + $0x44] sm:$0xf]
  %v248 = vld [vmem:[%s1 + $0x48] sm:$0xf]
  %v249 = vld [vmem:[%s1 + $0x4c] sm:$0xf]
  %v250 = vld [vmem:[%s1 + $0x50] sm:$0xf]
  %v251 = vld [vmem:[%s1 + $0x54] sm:$0xf]
  %v252 = vld [vmem:[%s1 + $0x58] sm:$0xf]
  %v253 = vld [vmem:[%s1 + $0x5c] sm:$0xf]
  %v254 = vld [vmem:[%s1 + $0x60] sm:$0xf]
  %v255 = vld [vmem:[%s1 + $0x64] sm:$0xf]
  %v256 = vld [vmem:[%s1 + $0x68] sm:$0xf]
  %v257 = vld [vmem:[%s1 + $0x6c] sm:$0xf]
  %v258 = vld [vmem:[%s1 + $0x70] sm:$0xf]
  %v259 = vld [vmem:[%s1 + $0x74] sm:$0xf]
  %v260 = vld [vmem:[%s1 + $0x78] sm:$0xf]
  %v261 = vld [vmem:[%s1 + $0x7c] sm:$0xf]
  %v262 = vld [vmem:[%s1 + $0x80] sm:$0xf]
  %v263 = vld [vmem:[%s1 + $0x84] sm:$0xf]
  %v264 = vld [vmem:[%s1 + $0x88] sm:$0xf]
  %v265 = vld [vmem:[%s1 + $0x8c] sm:$0xf]
  %v266 = vld [vmem:[%s1 + $0x90] sm:$0xf]
  %v267 = vld [vmem:[%s1 + $0x94] sm:$0xf]
  %v268 = vld [vmem:[%s1 + $0x98] sm:$0xf]
  %v269 = vld [vmem:[%s1 + $0x9c] sm:$0xf]
  %v270 = vld [vmem:[%s1 + $0xa0] sm:$0xf]
  %v271 = vld [vmem:[%s1 + $0xa4] sm:$0xf]
  %v272 = vld [vmem:[%s1 + $0xa8] sm:$0xf]
  %v273 = vld [vmem:[%s1 + $0xac] sm:$0xf]
  %v274 = vld [vmem:[%s1 + $0xb0] sm:$0xf]
  %v275 = vld [vmem:[%s1 + $0xb4] sm:$0xf]
  %v276 = vld [vmem:[%s1 + $0xb8] sm:$0xf]
  %v277 = vld [vmem:[%s1 + $0xbc] sm:$0xf]
  %v278 = vld [vmem:[%s1 + $0xc0] sm:$0xf]
  %v279 = vld [vmem:[%s1 + $0xc4] sm:$0xf]
  %v280 = vld [vmem:[%s1 + $0xc8] sm:$0xf]
  %v281 = vld [vmem:[%s1 + $0xcc] sm:$0xf]
  %v282 = vld [vmem:[%s1 + $0xd0] sm:$0xf]
  %v283 = vld [vmem:[%s1 + $0xd4] sm:$0xf]
  %v284 = vld [vmem:[%s1 + $0xd8] sm:$0xf]
  %v285 = vld [vmem:[%s1 + $0xdc] sm:$0xf]
  %v286 = vld [vmem:[%s1 + $0xe0] sm:$0xf]
  %v287 = vld [vmem:[%s1 + $0xe4] sm:$0xf]
  %v288 = vld [vmem:[%s1 + $0xe8] sm:$0xf]
  %v289 = vld [vmem:[%s1 + $0xec] sm:$0xf]
  %v290 = vld [vmem:[%s1 + $0xf0] sm:$0xf]
  %v291 = vld [vmem:[%s1 + $0xf4] sm:$0xf]
  %v292 = vld [vmem:[%s1 + $0xf8] sm:$0xf]
  %v293 = vld [vmem:[%s1 + $0xfc] sm:$0xf]
  %v294 = vld [vmem:[%s1 + $0x100] sm:$0xf]
  %v295 = vld [vmem:[%s1 + $0x104] sm:$0xf]
  %v296 = vld [vmem:[%s1 + $0x108] sm:$0xf]
  %v297 = vld [vmem:[%s1 + $0x10c] sm:$0xf]
  %v298 = vld [vmem:[%s1 + $0x110] sm:$0xf]
  %v299 = vld [vmem:[%s1 + $0x114] sm:$0xf]
  %v300 = vld [vmem:[%s1 + $0x118] sm:$0xf]
  %v301 = vld [vmem:[%s1 + $0x11c] sm:$0xf]
  %v302 = vld [vmem:[%s1 + $0x120] sm:$0xf]
  %v303 = vld [vmem:[%s1 + $0x124] sm:$0xf]
  %v304 = vld [vmem:[%s1 + $0x128] sm:$0xf]
  %v305 = vld [vmem:[%s1 + $0x12c] sm:$0xf]
  %v306 = vld [vmem:[%s1 + $0x130] sm:$0xf]
  %v307 = vld [vmem:[%s1 + $0x134] sm:$0xf]
  %v308 = vld [vmem:[%s1 + $0x138] sm:$0xf]
  %v309 = vld [vmem:[%s1 + $0x13c] sm:$0xf]
  %v310 = vld [vmem:[%s1 + $0x140] sm:$0xf]
  %v311 = vld [vmem:[%s1 + $0x144] sm:$0xf]
  %v312 = vld [vmem:[%s1 + $0x148] sm:$0xf]
  %v313 = vld [vmem:[%s1 + $0x14c] sm:$0xf]
  %v314 = vld [vmem:[%s1 + $0x150] sm:$0xf]
  %v315 = vld [vmem:[%s1 + $0x154] sm:$0xf]
  %v316 = vld [vmem:[%s1 + $0x158] sm:$0xf]
  %v317 = vld [vmem:[%s1 + $0x15c] sm:$0xf]
  %v318 = vld [vmem:[%s1 + $0x160] sm:$0xf]
  %v319 = vld [vmem:[%s1 + $0x164] sm:$0xf]
  %v320 = vld [vmem:[%s1 + $0x168] sm:$0xf]
  %v321 = vld [vmem:[%s1 + $0x16c] sm:$0xf]
  %v322 = vld [vmem:[%s1 + $0x170] sm:$0xf]
  %v323 = vld [vmem:[%s1 + $0x174] sm:$0xf]
  %v324 = vld [vmem:[%s1 + $0x178] sm:$0xf]
  %v325 = vld [vmem:[%s1 + $0x17c] sm:$0xf]
  %v326 = vld [vmem:[%s1 + $0x180] sm:$0xf]
  %v327 = vld [vmem:[%s1 + $0x184] sm:$0xf]
  %v328 = vld [vmem:[%s1 + $0x188] sm:$0xf]
  %v329 = vld [vmem:[%s1 + $0x18c] sm:$0xf]
  %v330 = vld [vmem:[%s1 + $0x190] sm:$0xf]
  %v331 = vld [vmem:[%s1 + $0x194] sm:$0xf]
  %v332 = vld [vmem:[%s1 + $0x198] sm:$0xf]
  %v333 = vld [vmem:[%s1 + $0x19c] sm:$0xf]
  %v334 = vld [vmem:[%s1 + $0x1a0] sm:$0xf]
  %v335 = vld [vmem:[%s1 + $0x1a4] sm:$0xf]
  %v336 = vld [vmem:[%s1 + $0x1a8] sm:$0xf]
  %v337 = vld [vmem:[%s1 + $0x1ac] sm:$0xf]
  %v338 = vld [vmem:[%s1 + $0x1b0] sm:$0xf]
  %v339 = vld [vmem:[%s1 + $0x1b4] sm:$0xf]
  %v340 = vld [vmem:[%s1 + $0x1b8] sm:$0xf]
  %v341 = vld [vmem:[%s1 + $0x1bc] sm:$0xf]
  %v342 = vld [vmem:[%s1 + $0x1c0] sm:$0xf]
  %v343 = vld [vmem:[%s1 + $0x1c4] sm:$0xf]
  %v344 = vld [vmem:[%s1 + $0x1c8] sm:$0xf]
  %v345 = vld [vmem:[%s1 + $0x1cc] sm:$0xf]
  %v346 = vld [vmem:[%s1 + $0x1d0] sm:$0xf]
  %v347 = vld [vmem:[%s1 + $0x1d4] sm:$0xf]
  %v348 = vld [vmem:[%s1 + $0x1d8] sm:$0xf]
  %v349 = vld [vmem:[%s1 + $0x1dc] sm:$0xf]
  %v350 = vld [vmem:[%s1 + $0x1e0] sm:$0xf]
  %v351 = vld [vmem:[%s1 + $0x1e4] sm:$0xf]
  %v352 = vld [vmem:[%s1 + $0x1e8] sm:$0xf]
  %v353 = vld [vmem:[%s1 + $0x1ec] sm:$0xf]
  %v354 = vld [vmem:[%s1 + $0x1f0] sm:$0xf]
  %v355 = vld [vmem:[%s1 + $0x1f4] sm:$0xf]
  %v356 = vld [vmem:[%s1 + $0x1f8] sm:$0xf]
  %v357 = vld [vmem:[%s1 + $0x1fc] sm:$0xf]
  %v358 = vld [vmem:[%s1 + $0x200] sm:$0xf]
  %v359 = vld [vmem:[%s1 + $0x204] sm:$0xf]
  %v360 = vld [vmem:[%s1 + $0x208] sm:$0xf]
  %v361 = vld [vmem:[%s1 + $0x20c] sm:$0xf]
  %v362 = vld [vmem:[%s1 + $0x210] sm:$0xf]
  %v363 = vld [vmem:[%s1 + $0x214] sm:$0xf]
  %v364 = vld [vmem:[%s1 + $0x218] sm:$0xf]
  %v365 = vld [vmem:[%s1 + $0x21c] sm:$0xf]
  %v366 = vld [vmem:[%s1 + $0x220] sm:$0xf]
  %v367 = vld [vmem:[%s1 + $0x224] sm:$0xf]
  %v368 = vld [vmem:[%s1 + $0x228] sm:$0xf]
  %v369 = vld [vmem:[%s1 + $0x22c] sm:$0xf]
  %v370 = vld [vmem:[%s1 + $0x230] sm:$0xf]
  %v371 = vld [vmem:[%s1 + $0x234] sm:$0xf]
  %v372 = vld [vmem:[%s1 + $0x238] sm:$0xf]
  %v373 = vld [vmem:[%s1 + $0x23c] sm:$0xf]
  %v374 = vld [vmem:[%s1 + $0x240] sm:$0xf]
  %v375 = vld [vmem:[%s1 + $0x244] sm:$0xf]
  %v376 = vld [vmem:[%s1 + $0x248] sm:$0xf]
  %v377 = vld [vmem:[%s1 + $0x24c] sm:$0xf]
  %v378 = vld [vmem:[%s1 + $0x250] sm:$0xf]
  %v379 = vld [vmem:[%s1 + $0x254] sm:$0xf]
  %v380 = vld [vmem:[%s1 + $0x258] sm:$0xf]
  %v381 = vld [vmem:[%s1 + $0x25c] sm:$0xf]
  %v382 = vld [vmem:[%s1 + $0x260] sm:$0xf]
  %v383 = vld [vmem:[%s1 + $0x264] sm:$0xf]
  %v384 = vld [vmem:[%s1 + $0x268] sm:$0xf]
  %v385 = vld [vmem:[%s1 + $0x26c] sm:$0xf]
  %v386 = vld [vmem:[%s1 + $0x270] sm:$0xf]
  %v387 = vld [vmem:[%s1 + $0x274] sm:$0xf]
  %v388 = vld [vmem:[%s1 + $0x278] sm:$0xf]
  %v389 = vld [vmem:[%s1 + $0x27c] sm:$0xf]
  %v390 = vld [vmem:[%s1 + $0x280] sm:$0xf]
  %v391 = vld [vmem:[%s1 + $0x284] sm:$0xf]
  %v392 = vld [vmem:[%s1 + $0x288] sm:$0xf]
  %v393 = vld [vmem:[%s1 + $0x28c] sm:$0xf]
  %v394 = vld [vmem:[%s1 + $0x290] sm:$0xf]
  %v395 = vld [vmem:[%s1 + $0x294] sm:$0xf]
  %v396 = vld [vmem:[%s1 + $0x298] sm:$0xf]
  %v397 = vld [vmem:[%s1 + $0x29c] sm:$0xf]
  %v398 = vld [vmem:[%s1 + $0x2a0] sm:$0xf]
  %v399 = vld [vmem:[%s1 + $0x2a4] sm:$0xf]
  %v400 = vld [vmem:[%s1 + $0x2a8] sm:$0xf]
  %v401 = vld [vmem:[%s1 + $0x2ac] sm:$0xf]
  %v402 = vld [vmem:[%s1 + $0x2b0] sm:$0xf]
  %v403 = vld [vmem:[%s1 + $0x2b4] sm:$0xf]
  %v404 = vld [vmem:[%s1 + $0x2b8] sm:$0xf]
  %v405 = vld [vmem:[%s1 + $0x2bc] sm:$0xf]
  %v406 = vld [vmem:[%s1 + $0x2c0] sm:$0xf]
  %v407 = vld [vmem:[%s1 + $0x2c4] sm:$0xf]
  %v408 = vld [vmem:[%s1 + $0x2c8] sm:$0xf]
  %v409 = vld [vmem:[%s1 + $0x2cc] sm:$0xf]
  %v410 = vld [vmem:[%s1 + $0x2d0] sm:$0xf]
  %v411 = vld [vmem:[%s1 + $0x2d4] sm:$0xf]
  %v412 = vld [vmem:[%s1 + $0x2d8] sm:$0xf]
  %v413 = vld [vmem:[%s1 + $0x2dc] sm:$0xf]
  %v414 = vld [vmem:[%s1 + $0x2e0] sm:$0xf]
  %v415 = vld [vmem:[%s1 + $0x2e4] sm:$0xf]
  %v416 = vld [vmem:[%s1 + $0x2e8] sm:$0xf]
  %v417 = vld [vmem:[%s1 + $0x2ec] sm:$0xf]
  %v418 = vld [vmem:[%s1 + $0x2f0] sm:$0xf]
  %v419 = vld [vmem:[%s1 + $0x2f4] sm:$0xf]
  %v420 = vld [vmem:[%s1 + $0x2f8] sm:$0xf]
  %v421 = vld [vmem:[%s1 + $0x2fc] sm:$0xf]
  %v422 = vld [vmem:[%s1 + $0x300] sm:$0xf]
  %v423 = vld [vmem:[%s1 + $0x304] sm:$0xf]
  %v424 = vld [vmem:[%s1 + $0x308] sm:$0xf]
  %v425 = vld [vmem:[%s1 + $0x30c] sm:$0xf]
  %v426 = vld [vmem:[%s1 + $0x310] sm:$0xf]
  %v427 = vld [vmem:[%s1 + $0x314] sm:$0xf]
  %v428 = vld [vmem:[%s1 + $0x318] sm:$0xf]
  %v429 = vld [vmem:[%s1 + $0x31c] sm:$0xf]
  %v430 = vld [vmem:[%s1 + $0x320] sm:$0xf]
  %v431 = vld [vmem:[%s1 + $0x324] sm:$0xf]
  %v432 = vld [vmem:[%s1 + $0x328] sm:$0xf]
  %v433 = vld [vmem:[%s1 + $0x32c] sm:$0xf]
  %v434 = vld [vmem:[%s1 + $0x330] sm:$0xf]
  %v435 = vld [vmem:[%s1 + $0x334] sm:$0xf]
  %v436 = vld [vmem:[%s1 + $0x338] sm:$0xf]
  %v437 = vld [vmem:[%s1 + $0x33c] sm:$0xf]
  %v438 = vld [vmem:[%s1 + $0x340] sm:$0xf]
  %v439 = vld [vmem:[%s1 + $0x344] sm:$0xf]
  %v440 = vld [vmem:[%s1 + $0x348] sm:$0xf]
  %v441 = vld [vmem:[%s1 + $0x34c] sm:$0xf]
  %v442 = vld [vmem:[%s1 + $0x350] sm:$0xf]
  %v443 = vld [vmem:[%s1 + $0x354] sm:$0xf]
  %v444 = vld [vmem:[%s1 + $0x358] sm:$0xf]
  %v445 = vld [vmem:[%s1 + $0x35c] sm:$0xf]
  %v446 = vld [vmem:[%s1 + $0x360] sm:$0xf]
  %v447 = vld [vmem:[%s1 + $0x364] sm:$0xf]
  %v448 = vld [vmem:[%s1 + $0x368] sm:$0xf]
  %v449 = vld [vmem:[%s1 + $0x36c] sm:$0xf]
  %v450 = vld [vmem:[%s1 + $0x370] sm:$0xf]
  %v451 = vld [vmem:[%s1 + $0x374] sm:$0xf]
  %v452 = vld [vmem:[%s1 + $0x378] sm:$0xf]
  %v453 = vld [vmem:[%s1 + $0x37c] sm:$0xf]
  %v454 = vld [vmem:[%s1 + $0x380] sm:$0xf]
  %v455 = vld [vmem:[%s1 + $0x384] sm:$0xf]
  %v456 = vld [vmem:[%s1 + $0x388] sm:$0xf]
  %v457 = vld [vmem:[%s1 + $0x38c] sm:$0xf]
  %v458 = vld [vmem:[%s1 + $0x390] sm:$0xf]
  %v459 = vld [vmem:[%s1 + $0x394] sm:$0xf]
  %v460 = vld [vmem:[%s1 + $0x398] sm:$0xf]
  %v461 = vld [vmem:[%s1 + $0x39c] sm:$0xf]
  %v462 = vld [vmem:[%s1 + $0x3a0] sm:$0xf]
  %v463 = vld [vmem:[%s1 + $0x3a4] sm:$0xf]
  %v464 = vld [vmem:[%s1 + $0x3a8] sm:$0xf]
  %v465 = vld [vmem:[%s1 + $0x3ac] sm:$0xf]
  %v466 = vld [vmem:[%s1 + $0x3b0] sm:$0xf]
  %v467 = vld [vmem:[%s1 + $0x3b4] sm:$0xf]
  %v468 = vld [vmem:[%s1 + $0x3b8] sm:$0xf]
  %v469 = vld [vmem:[%s1 + $0x3bc] sm:$0xf]
  %v470 = vld [vmem:[%s1 + $0x3c0] sm:$0xf]
  %v471 = vld [vmem:[%s1 + $0x3c4] sm:$0xf]
  %v472 = vld [vmem:[%s1 + $0x3c8] sm:$0xf]
  %v473 = vld [vmem:[%s1 + $0x3cc] sm:$0xf]
  %v474 = vld [vmem:[%s1 + $0x3d0] sm:$0xf]
  %v475 = vld [vmem:[%s1 + $0x3d4] sm:$0xf]
  %v476 = vld [vmem:[%s1 + $0x3d8] sm:$0xf]
  %v477 = vld [vmem:[%s1 + $0x3dc] sm:$0xf]
  %v478 = vld [vmem:[%s1 + $0x3e0] sm:$0xf]
  %v479 = vld [vmem:[%s1 + $0x3e4] sm:$0xf]
  %v480 = vld [vmem:[%s1 + $0x3e8] sm:$0xf]
  %v481 = vld [vmem:[%s1 + $0x3ec] sm:$0xf]
  %v482 = vld [vmem:[%s1 + $0x3f0] sm:$0xf]
  %v483 = vld [vmem:[%s1 + $0x3f4] sm:$0xf]
  %v484 = vld [vmem:[%s1 + $0x3f8] sm:$0xf]
  %v485 = vld [vmem:[%s1 + $0x3fc] sm:$0xf]
  %v486 = vld [vmem:[%s1 + $0x400] sm:$0xf]
  %v487 = vld [vmem:[%s1 + $0x404] sm:$0xf]
  %v488 = vld [vmem:[%s1 + $0x408] sm:$0xf]
  %v489 = vld [vmem:[%s1 + $0x40c] sm:$0xf]
  %v490 = vld [vmem:[%s1 + $0x410] sm:$0xf]
  %v491 = vld [vmem:[%s1 + $0x414] sm:$0xf]
  %v492 = vld [vmem:[%s1 + $0x418] sm:$0xf]
  %v493 = vld [vmem:[%s1 + $0x41c] sm:$0xf]
  %v494 = vld [vmem:[%s1 + $0x420] sm:$0xf]
  %v495 = vld [vmem:[%s1 + $0x424] sm:$0xf]
  %v496 = vld [vmem:[%s1 + $0x428] sm:$0xf]
  %v497 = vld [vmem:[%s1 + $0x42c] sm:$0xf]
  %v498 = vld [vmem:[%s1 + $0x430] sm:$0xf]
  %v499 = vld [vmem:[%s1 + $0x434] sm:$0xf]
  %v500 = vld [vmem:[%s1 + $0x438] sm:$0xf]
  %v501 = vld [vmem:[%s1 + $0x43c] sm:$0xf]
  %v502 = vld [vmem:[%s1 + $0x440] sm:$0xf]
  %v503 = vld [vmem:[%s1 + $0x444] sm:$0xf]
  %v504 = vld [vmem:[%s1 + $0x448] sm:$0xf]
  %v505 = vld [vmem:[%s1 + $0x44c] sm:$0xf]
  %v506 = vld [vmem:[%s1 + $0x450] sm:$0xf]
  %v507 = vld [vmem:[%s1 + $0x454] sm:$0xf]
  %v508 = vld [vmem:[%s1 + $0x458] sm:$0xf]
  %v509 = vld [vmem:[%s1 + $0x45c] sm:$0xf]
  %v510 = vld [vmem:[%s1 + $0x460] sm:$0xf]
  %v511 = vld [vmem:[%s1 + $0x464] sm:$0xf]
  %v512 = vld [vmem:[%s1 + $0x468] sm:$0xf]
  %v513 = vld [vmem:[%s1 + $0x46c] sm:$0xf]
  %v514 = vld [vmem:[%s1 + $0x470] sm:$0xf]
  %v515 = vld [vmem:[%s1 + $0x474] sm:$0xf]
  %v516 = vld [vmem:[%s1 + $0x478] sm:$0xf]
  %v517 = vld [vmem:[%s1 + $0x47c] sm:$0xf]
  %v518 = vld [vmem:[%s1 + $0x480] sm:$0xf]
  %v519 = vld [vmem:[%s1 + $0x484] sm:$0xf]
  %v520 = vld [vmem:[%s1 + $0x488] sm:$0xf]
  %v521 = vld [vmem:[%s1 + $0x48c] sm:$0xf]
  %v522 = vld [vmem:[%s1 + $0x490] sm:$0xf]
  %v523 = vld [vmem:[%s1 + $0x494] sm:$0xf]
  %v524 = vld [vmem:[%s1 + $0x498] sm:$0xf]
  %v525 = vld [vmem:[%s1 + $0x49c] sm:$0xf]
  %v526 = vld [vmem:[%s1 + $0x4a0] sm:$0xf]
  %v527 = vld [vmem:[%s1 + $0x4a4] sm:$0xf]
  %v528 = vld [vmem:[%s1 + $0x4a8] sm:$0xf]
  %v529 = vld [vmem:[%s1 + $0x4ac] sm:$0xf]
  %v530 = vld [vmem:[%s1 + $0x4b0] sm:$0xf]
  %v531 = vld [vmem:[%s1 + $0x4b4] sm:$0xf]
  %v532 = vld [vmem:[%s1 + $0x4b8] sm:$0xf]
  %v533 = vld [vmem:[%s1 + $0x4bc] sm:$0xf]
  %v534 = vld [vmem:[%s1 + $0x4c0] sm:$0xf]
  %v535 = vld [vmem:[%s1 + $0x4c4] sm:$0xf]
  %v536 = vld [vmem:[%s1 + $0x4c8] sm:$0xf]
  %v537 = vld [vmem:[%s1 + $0x4cc] sm:$0xf]
  %v538 = vld [vmem:[%s1 + $0x4d0] sm:$0xf]
  %v539 = vld [vmem:[%s1 + $0x4d4] sm:$0xf]
  %v540 = vld [vmem:[%s1 + $0x4d8] sm:$0xf]
  %v541 = vld [vmem:[%s1 + $0x4dc] sm:$0xf]
  %v542 = vld [vmem:[%s1 + $0x4e0] sm:$0xf]
  %v543 = vld [vmem:[%s1 + $0x4e4] sm:$0xf]
  %v544 = vld [vmem:[%s1 + $0x4e8] sm:$0xf]
  %v545 = vld [vmem:[%s1 + $0x4ec] sm:$0xf]
  %v546 = vld [vmem:[%s1 + $0x4f0] sm:$0xf]
  %v547 = vld [vmem:[%s1 + $0x4f4] sm:$0xf]
  %v548 = vld [vmem:[%s1 + $0x4f8] sm:$0xf]
  %v549 = vld [vmem:[%s1 + $0x4fc] sm:$0xf]
  %v550 = vld [vmem:[%s1 + $0x500] sm:$0xf]
  %v551 = vld [vmem:[%s1 + $0x504] sm:$0xf]
  %v552 = vld [vmem:[%s1 + $0x508] sm:$0xf]
  %v553 = vld [vmem:[%s1 + $0x50c] sm:$0xf]
  %v554 = vld [vmem:[%s1 + $0x510] sm:$0xf]
  %v555 = vld [vmem:[%s1 + $0x514] sm:$0xf]
  %v556 = vld [vmem:[%s1 + $0x518] sm:$0xf]
  %v557 = vld [vmem:[%s1 + $0x51c] sm:$0xf]
  %v558 = vld [vmem:[%s1 + $0x520] sm:$0xf]
  %v559 = vld [vmem:[%s1 + $0x524] sm:$0xf]
  %v560 = vld [vmem:[%s1 + $0x528] sm:$0xf]
  %v561 = vld [vmem:[%s1 + $0x52c] sm:$0xf]
  %v562 = vld [vmem:[%s1 + $0x530] sm:$0xf]
  %v563 = vld [vmem:[%s1 + $0x534] sm:$0xf]
  %v564 = vld [vmem:[%s1 + $0x538] sm:$0xf]
  %v565 = vld [vmem:[%s1 + $0x53c] sm:$0xf]
  %v566 = vld [vmem:[%s1 + $0x540] sm:$0xf]
  %v567 = vld [vmem:[%s1 + $0x544] sm:$0xf]
  %v568 = vld [vmem:[%s1 + $0x548] sm:$0xf]
  %v569 = vld [vmem:[%s1 + $0x54c] sm:$0xf]
  %v570 = vld [vmem:[%s1 + $0x550] sm:$0xf]
  %v571 = vld [vmem:[%s1 + $0x554] sm:$0xf]
  %v572 = vld [vmem:[%s1 + $0x558] sm:$0xf]
  %v573 = vld [vmem:[%s1 + $0x55c] sm:$0xf]
  %v574 = vld [vmem:[%s1 + $0x560] sm:$0xf]
  %v575 = vld [vmem:[%s1 + $0x564] sm:$0xf]
  %v576 = vld [vmem:[%s1 + $0x568] sm:$0xf]
  %v577 = vld [vmem:[%s1 + $0x56c] sm:$0xf]
  %v578 = vld [vmem:[%s1 + $0x570] sm:$0xf]
  %v579 = vld [vmem:[%s1 + $0x574] sm:$0xf]
  %v580 = vld [vmem:[%s1 + $0x578] sm:$0xf]
  %v581 = vld [vmem:[%s1 + $0x57c] sm:$0xf]
  %v582 = vld [vmem:[%s1 + $0x580] sm:$0xf]
  %v583 = vld [vmem:[%s1 + $0x584] sm:$0xf]
  %v584 = vld [vmem:[%s1 + $0x588] sm:$0xf]
  %v585 = vld [vmem:[%s1 + $0x58c] sm:$0xf]
  %v586 = vld [vmem:[%s1 + $0x590] sm:$0xf]
  %v587 = vld [vmem:[%s1 + $0x594] sm:$0xf]
  %v588 = vld [vmem:[%s1 + $0x598] sm:$0xf]
  %v589 = vld [vmem:[%s1 + $0x59c] sm:$0xf]
  %v590 = vld [vmem:[%s1 + $0x5a0] sm:$0xf]
  %v591 = vld [vmem:[%s1 + $0x5a4] sm:$0xf]
  %v592 = vld [vmem:[%s1 + $0x5a8] sm:$0xf]
  %v593 = vld [vmem:[%s1 + $0x5ac] sm:$0xf]
  %v594 = vld [vmem:[%s1 + $0x5b0] sm:$0xf]
  %v595 = vld [vmem:[%s1 + $0x5b4] sm:$0xf]
  %v596 = vld [vmem:[%s1 + $0x5b8] sm:$0xf]
  %v597 = vld [vmem:[%s1 + $0x5bc] sm:$0xf]
  %v598 = vld [vmem:[%s1 + $0x5c0] sm:$0xf]
  %v599 = vld [vmem:[%s1 + $0x5c4] sm:$0xf]
  %v600 = vld [vmem:[%s1 + $0x5c8] sm:$0xf]
  %v601 = vld [vmem:[%s1 + $0x5cc] sm:$0xf]
  %v602 = vld [vmem:[%s1 + $0x5d0] sm:$0xf]
  %v603 = vld [vmem:[%s1 + $0x5d4] sm:$0xf]
  %v604 = vld [vmem:[%s1 + $0x5d8] sm:$0xf]
  %v605 = vld [vmem:[%s1 + $0x5dc] sm:$0xf]
  %v606 = vld [vmem:[%s1 + $0x5e0] sm:$0xf]
  %v607 = vld [vmem:[%s1 + $0x5e4] sm:$0xf]
  %v608 = vld [vmem:[%s1 + $0x5e8] sm:$0xf]
  %v609 = vld [vmem:[%s1 + $0x5ec] sm:$0xf]
  %v610 = vld [vmem:[%s1 + $0x5f0] sm:$0xf]
  %v611 = vld [vmem:[%s1 + $0x5f4] sm:$0xf]
  %v612 = vld [vmem:[%s1 + $0x5f8] sm:$0xf]
  %v613 = vld [vmem:[%s1 + $0x5fc] sm:$0xf]
  %v614 = vld [vmem:[%s1 + $0x600] sm:$0xf]
  %v615 = vld [vmem:[%s1 + $0x604] sm:$0xf]
  %v616 = vld [vmem:[%s1 + $0x608] sm:$0xf]
  %v617 = vld [vmem:[%s1 + $0x60c] sm:$0xf]
  %v618 = vld [vmem:[%s1 + $0x610] sm:$0xf]
  %v619 = vld [vmem:[%s1 + $0x614] sm:$0xf]
  %v620 = vld [vmem:[%s1 + $0x618] sm:$0xf]
  %v621 = vld [vmem:[%s1 + $0x61c] sm:$0xf]
  %v622 = vld [vmem:[%s1 + $0x620] sm:$0xf]
  %v623 = vld [vmem:[%s1 + $0x624] sm:$0xf]
  %v624 = vld [vmem:[%s1 + $0x628] sm:$0xf]
  %v625 = vld [vmem:[%s1 + $0x62c] sm:$0xf]
  %v626 = vld [vmem:[%s1 + $0x630] sm:$0xf]
  %v627 = vld [vmem:[%s1 + $0x634] sm:$0xf]
  %v628 = vld [vmem:[%s1 + $0x638] sm:$0xf]
  %v629 = vld [vmem:[%s1 + $0x63c] sm:$0xf]
  %v630 = vld [vmem:[%s1 + $0x640] sm:$0xf]
  %v631 = vld [vmem:[%s1 + $0x644] sm:$0xf]
  %v632 = vld [vmem:[%s1 + $0x648] sm:$0xf]
  %v633 = vld [vmem:[%s1 + $0x64c] sm:$0xf]
  %v634 = vld [vmem:[%s1 + $0x650] sm:$0xf]
  %v635 = vld [vmem:[%s1 + $0x654] sm:$0xf]
  %v636 = vld [vmem:[%s1 + $0x658] sm:$0xf]
  %v637 = vld [vmem:[%s1 + $0x65c] sm:$0xf]
  %v638 = vld [vmem:[%s1 + $0x660] sm:$0xf]
  %v639 = vld [vmem:[%s1 + $0x664] sm:$0xf]
  %v640 = vld [vmem:[%s1 + $0x668] sm:$0xf]
  %v641 = vld [vmem:[%s1 + $0x66c] sm:$0xf]
  %v642 = vld [vmem:[%s1 + $0x670] sm:$0xf]
  %v643 = vld [vmem:[%s1 + $0x674] sm:$0xf]
  %v644 = vld [vmem:[%s1 + $0x678] sm:$0xf]
  %v645 = vld [vmem:[%s1 + $0x67c] sm:$0xf]
  %v646 = vld [vmem:[%s1 + $0x680] sm:$0xf]
  %v647 = vld [vmem:[%s1 + $0x684] sm:$0xf]
  %v648 = vld [vmem:[%s1 + $0x688] sm:$0xf]
  %v649 = vld [vmem:[%s1 + $0x68c] sm:$0xf]
  %v650 = vld [vmem:[%s1 + $0x690] sm:$0xf]
  %v651 = vld [vmem:[%s1 + $0x694] sm:$0xf]
  %v652 = vld [vmem:[%s1 + $0x698] sm:$0xf]
  %v653 = vld [vmem:[%s1 + $0x69c] sm:$0xf]
  %v654 = vld [vmem:[%s1 + $0x6a0] sm:$0xf]
  %v655 = vld [vmem:[%s1 + $0x6a4] sm:$0xf]
  %v656 = vld [vmem:[%s1 + $0x6a8] sm:$0xf]
  %v657 = vld [vmem:[%s1 + $0x6ac] sm:$0xf]
  %v658 = vld [vmem:[%s1 + $0x6b0] sm:$0xf]
  %v659 = vld [vmem:[%s1 + $0x6b4] sm:$0xf]
  %v660 = vld [vmem:[%s1 + $0x6b8] sm:$0xf]
  %v661 = vld [vmem:[%s1 + $0x6bc] sm:$0xf]
  %v662 = vld [vmem:[%s1 + $0x6c0] sm:$0xf]
  %v663 = vld [vmem:[%s1 + $0x6c4] sm:$0xf]
  %v664 = vld [vmem:[%s1 + $0x6c8] sm:$0xf]
  %v665 = vld [vmem:[%s1 + $0x6cc] sm:$0xf]
  %v666 = vld [vmem:[%s1 + $0x6d0] sm:$0xf]
  %v667 = vld [vmem:[%s1 + $0x6d4] sm:$0xf]
  %v668 = vld [vmem:[%s1 + $0x6d8] sm:$0xf]
  %v669 = vld [vmem:[%s1 + $0x6dc] sm:$0xf]
  %v670 = vld [vmem:[%s1 + $0x6e0] sm:$0xf]
  %v671 = vld [vmem:[%s1 + $0x6e4] sm:$0xf]
  %v672 = vld [vmem:[%s1 + $0x6e8] sm:$0xf]
  %v673 = vld [vmem:[%s1 + $0x6ec] sm:$0xf]
  %v674 = vld [vmem:[%s1 + $0x6f0] sm:$0xf]
  %v675 = vld [vmem:[%s1 + $0x6f4] sm:$0xf]
  %v676 = vld [vmem:[%s1 + $0x6f8] sm:$0xf]
  %v677 = vld [vmem:[%s1 + $0x6fc] sm:$0xf]
  %v678 = vld [vmem:[%s1 + $0x700] sm:$0xf]
  %v679 = vld [vmem:[%s1 + $0x704] sm:$0xf]
  %v680 = vld [vmem:[%s1 + $0x708] sm:$0xf]
  %v681 = vld [vmem:[%s1 + $0x70c] sm:$0xf]
  %v682 = vld [vmem:[%s1 + $0x710] sm:$0xf]
  %v683 = vld [vmem:[%s1 + $0x714] sm:$0xf]
  %v684 = vld [vmem:[%s1 + $0x718] sm:$0xf]
  %v685 = vld [vmem:[%s1 + $0x71c] sm:$0xf]
  %v686 = vld [vmem:[%s1 + $0x720] sm:$0xf]
  %v687 = vld [vmem:[%s1 + $0x724] sm:$0xf]
  %v688 = vld [vmem:[%s1 + $0x728] sm:$0xf]
  %v689 = vld [vmem:[%s1 + $0x72c] sm:$0xf]
  %v690 = vld [vmem:[%s1 + $0x730] sm:$0xf]
  %v691 = vld [vmem:[%s1 + $0x734] sm:$0xf]
  %v692 = vld [vmem:[%s1 + $0x738] sm:$0xf]
  %v693 = vld [vmem:[%s1 + $0x73c] sm:$0xf]
  %v694 = vld [vmem:[%s1 + $0x740] sm:$0xf]
  %v695 = vld [vmem:[%s1 + $0x744] sm:$0xf]
  %v696 = vld [vmem:[%s1 + $0x748] sm:$0xf]
  %v697 = vld [vmem:[%s1 + $0x74c] sm:$0xf]
  %v698 = vld [vmem:[%s1 + $0x750] sm:$0xf]
  %v699 = vld [vmem:[%s1 + $0x754] sm:$0xf]
  %v700 = vld [vmem:[%s1 + $0x758] sm:$0xf]
  %v701 = vld [vmem:[%s1 + $0x75c] sm:$0xf]
  %v702 = vld [vmem:[%s1 + $0x760] sm:$0xf]
  %v703 = vld [vmem:[%s1 + $0x764] sm:$0xf]
  %v704 = vld [vmem:[%s1 + $0x768] sm:$0xf]
  %v705 = vld [vmem:[%s1 + $0x76c] sm:$0xf]
  %v706 = vld [vmem:[%s1 + $0x770] sm:$0xf]
  %v707 = vld [vmem:[%s1 + $0x774] sm:$0xf]
  %v708 = vld [vmem:[%s1 + $0x778] sm:$0xf]
  %v709 = vld [vmem:[%s1 + $0x77c] sm:$0xf]
  %v710 = vld [vmem:[%s1 + $0x780] sm:$0xf]
  %v711 = vld [vmem:[%s1 + $0x784] sm:$0xf]
  %v712 = vld [vmem:[%s1 + $0x788] sm:$0xf]
  %v713 = vld [vmem:[%s1 + $0x78c] sm:$0xf]
  %v714 = vld [vmem:[%s1 + $0x790] sm:$0xf]
  %v715 = vld [vmem:[%s1 + $0x794] sm:$0xf]
  %v716 = vld [vmem:[%s1 + $0x798] sm:$0xf]
  %v717 = vld [vmem:[%s1 + $0x79c] sm:$0xf]
  %v718 = vld [vmem:[%s1 + $0x7a0] sm:$0xf]
  %v719 = vld [vmem:[%s1 + $0x7a4] sm:$0xf]
  %v720 = vld [vmem:[%s1 + $0x7a8] sm:$0xf]
  %v721 = vld [vmem:[%s1 + $0x7ac] sm:$0xf]
  %v722 = vld [vmem:[%s1 + $0x7b0] sm:$0xf]
  %v723 = vld [vmem:[%s1 + $0x7b4] sm:$0xf]
  %v724 = vld [vmem:[%s1 + $0x7b8] sm:$0xf]
  %v725 = vld [vmem:[%s1 + $0x7bc] sm:$0xf]
  %v726 = vld [vmem:[%s1 + $0x7c0] sm:$0xf]
  %v727 = vld [vmem:[%s1 + $0x7c4] sm:$0xf]
  %v728 = vld [vmem:[%s1 + $0x7c8] sm:$0xf]
  %v729 = vld [vmem:[%s1 + $0x7cc] sm:$0xf]
  %v730 = vld [vmem:[%s1 + $0x7d0] sm:$0xf]
  %v731 = vld [vmem:[%s1 + $0x7d4] sm:$0xf]
  %v732 = vld [vmem:[%s1 + $0x7d8] sm:$0xf]
  %v733 = vld [vmem:[%s1 + $0x7dc] sm:$0xf]
  %v734 = vld [vmem:[%s1 + $0x7e0] sm:$0xf]
  %v735 = vld [vmem:[%s1 + $0x7e4] sm:$0xf]
  %v736 = vld [vmem:[%s1 + $0x7e8] sm:$0xf]
  %v737 = vld [vmem:[%s1 + $0x7ec] sm:$0xf]
  %v738 = vld [vmem:[%s1 + $0x7f0] sm:$0xf]
  %v739 = vld [vmem:[%s1 + $0x7f4] sm:$0xf]
  %v740 = vld [vmem:[%s1 + $0x7f8] sm:$0xf]
  %v741 = vld [vmem:[%s1 + $0x7fc] sm:$0xf]
  %v1254 = vunpack.c.l.b16 %v230
  %v1255 = vunpack.c.l.b16 %v231
  %v1256 = vunpack.c.l.b16 %v232
  %v1257 = vunpack.c.l.b16 %v233
  %v1258 = vunpack.c.l.b16 %v234
  %v1259 = vunpack.c.l.b16 %v235
  %v1260 = vunpack.c.l.b16 %v236
  %v1261 = vunpack.c.l.b16 %v237
  %v1262 = vunpack.c.l.b16 %v238
  %v1263 = vunpack.c.l.b16 %v239
  %v1264 = vunpack.c.l.b16 %v240
  %v1265 = vunpack.c.l.b16 %v241
  %v1266 = vunpack.c.l.b16 %v242
  %v1267 = vunpack.c.l.b16 %v243
  %v1268 = vunpack.c.l.b16 %v244
  %v1269 = vunpack.c.l.b16 %v245
  %v1270 = vunpack.c.l.b16 %v246
  %v1271 = vunpack.c.l.b16 %v247
  %v1272 = vunpack.c.l.b16 %v248
  %v1273 = vunpack.c.l.b16 %v249
  %v1274 = vunpack.c.l.b16 %v250
  %v1275 = vunpack.c.l.b16 %v251
  %v1276 = vunpack.c.l.b16 %v252
  %v1277 = vunpack.c.l.b16 %v253
  %v1278 = vunpack.c.l.b16 %v254
  %v1279 = vunpack.c.l.b16 %v255
  %v1280 = vunpack.c.l.b16 %v256
  %v1281 = vunpack.c.l.b16 %v257
  %v1282 = vunpack.c.l.b16 %v258
  %v1283 = vunpack.c.l.b16 %v259
  %v1284 = vunpack.c.l.b16 %v260
  %v1285 = vunpack.c.l.b16 %v261
  %v1286 = vunpack.c.l.b16 %v262
  %v1287 = vunpack.c.l.b16 %v263
  %v1288 = vunpack.c.l.b16 %v264
  %v1289 = vunpack.c.l.b16 %v265
  %v1290 = vunpack.c.l.b16 %v266
  %v1291 = vunpack.c.l.b16 %v267
  %v1292 = vunpack.c.l.b16 %v268
  %v1293 = vunpack.c.l.b16 %v269
  %v1294 = vunpack.c.l.b16 %v270
  %v1295 = vunpack.c.l.b16 %v271
  %v1296 = vunpack.c.l.b16 %v272
  %v1297 = vunpack.c.l.b16 %v273
  %v1298 = vunpack.c.l.b16 %v274
  %v1299 = vunpack.c.l.b16 %v275
  %v1300 = vunpack.c.l.b16 %v276
  %v1301 = vunpack.c.l.b16 %v277
  %v1302 = vunpack.c.l.b16 %v278
  %v1303 = vunpack.c.l.b16 %v279
  %v1304 = vunpack.c.l.b16 %v280
  %v1305 = vunpack.c.l.b16 %v281
  %v1306 = vunpack.c.l.b16 %v282
  %v1307 = vunpack.c.l.b16 %v283
  %v1308 = vunpack.c.l.b16 %v284
  %v1309 = vunpack.c.l.b16 %v285
  %v1310 = vunpack.c.l.b16 %v286
  %v1311 = vunpack.c.l.b16 %v287
  %v1312 = vunpack.c.l.b16 %v288
  %v1313 = vunpack.c.l.b16 %v289
  %v1314 = vunpack.c.l.b16 %v290
  %v1315 = vunpack.c.l.b16 %v291
  %v1316 = vunpack.c.l.b16 %v292
  %v1317 = vunpack.c.l.b16 %v293
  %v1318 = vunpack.c.l.b16 %v294
  %v1319 = vunpack.c.l.b16 %v295
  %v1320 = vunpack.c.l.b16 %v296
  %v1321 = vunpack.c.l.b16 %v297
  %v1322 = vunpack.c.l.b16 %v298
  %v1323 = vunpack.c.l.b16 %v299
  %v1324 = vunpack.c.l.b16 %v300
  %v1325 = vunpack.c.l.b16 %v301
  %v1326 = vunpack.c.l.b16 %v302
  %v1327 = vunpack.c.l.b16 %v303
  %v1328 = vunpack.c.l.b16 %v304
  %v1329 = vunpack.c.l.b16 %v305
  %v1330 = vunpack.c.l.b16 %v306
  %v1331 = vunpack.c.l.b16 %v307
  %v1332 = vunpack.c.l.b16 %v308
  %v1333 = vunpack.c.l.b16 %v309
  %v1334 = vunpack.c.l.b16 %v310
  %v1335 = vunpack.c.l.b16 %v311
  %v1336 = vunpack.c.l.b16 %v312
  %v1337 = vunpack.c.l.b16 %v313
  %v1338 = vunpack.c.l.b16 %v314
  %v1339 = vunpack.c.l.b16 %v315
  %v1340 = vunpack.c.l.b16 %v316
  %v1341 = vunpack.c.l.b16 %v317
  %v1342 = vunpack.c.l.b16 %v318
  %v1343 = vunpack.c.l.b16 %v319
  %v1344 = vunpack.c.l.b16 %v320
  %v1345 = vunpack.c.l.b16 %v321
  %v1346 = vunpack.c.l.b16 %v322
  %v1347 = vunpack.c.l.b16 %v323
  %v1348 = vunpack.c.l.b16 %v324
  %v1349 = vunpack.c.l.b16 %v325
  %v1350 = vunpack.c.l.b16 %v326
  %v1351 = vunpack.c.l.b16 %v327
  %v1352 = vunpack.c.l.b16 %v328
  %v1353 = vunpack.c.l.b16 %v329
  %v1354 = vunpack.c.l.b16 %v330
  %v1355 = vunpack.c.l.b16 %v331
  %v1356 = vunpack.c.l.b16 %v332
  %v1357 = vunpack.c.l.b16 %v333
  %v1358 = vunpack.c.l.b16 %v334
  %v1359 = vunpack.c.l.b16 %v335
  %v1360 = vunpack.c.l.b16 %v336
  %v1361 = vunpack.c.l.b16 %v337
  %v1362 = vunpack.c.l.b16 %v338
  %v1363 = vunpack.c.l.b16 %v339
  %v1364 = vunpack.c.l.b16 %v340
  %v1365 = vunpack.c.l.b16 %v341
  %v1366 = vunpack.c.l.b16 %v342
  %v1367 = vunpack.c.l.b16 %v343
  %v1368 = vunpack.c.l.b16 %v344
  %v1369 = vunpack.c.l.b16 %v345
  %v1370 = vunpack.c.l.b16 %v346
  %v1371 = vunpack.c.l.b16 %v347
  %v1372 = vunpack.c.l.b16 %v348
  %v1373 = vunpack.c.l.b16 %v349
  %v1374 = vunpack.c.l.b16 %v350
  %v1375 = vunpack.c.l.b16 %v351
  %v1376 = vunpack.c.l.b16 %v352
  %v1377 = vunpack.c.l.b16 %v353
  %v1378 = vunpack.c.l.b16 %v354
  %v1379 = vunpack.c.l.b16 %v355
  %v1380 = vunpack.c.l.b16 %v356
  %v1381 = vunpack.c.l.b16 %v357
  %v1382 = vunpack.c.l.b16 %v358
  %v1383 = vunpack.c.l.b16 %v359
  %v1384 = vunpack.c.l.b16 %v360
  %v1385 = vunpack.c.l.b16 %v361
  %v1386 = vunpack.c.l.b16 %v362
  %v1387 = vunpack.c.l.b16 %v363
  %v1388 = vunpack.c.l.b16 %v364
  %v1389 = vunpack.c.l.b16 %v365
  %v1390 = vunpack.c.l.b16 %v366
  %v1391 = vunpack.c.l.b16 %v367
  %v1392 = vunpack.c.l.b16 %v368
  %v1393 = vunpack.c.l.b16 %v369
  %v1394 = vunpack.c.l.b16 %v370
  %v1395 = vunpack.c.l.b16 %v371
  %v1396 = vunpack.c.l.b16 %v372
  %v1397 = vunpack.c.l.b16 %v373
  %v1398 = vunpack.c.l.b16 %v374
  %v1399 = vunpack.c.l.b16 %v375
  %v1400 = vunpack.c.l.b16 %v376
  %v1401 = vunpack.c.l.b16 %v377
  %v1402 = vunpack.c.l.b16 %v378
  %v1403 = vunpack.c.l.b16 %v379
  %v1404 = vunpack.c.l.b16 %v380
  %v1405 = vunpack.c.l.b16 %v381
  %v1406 = vunpack.c.l.b16 %v382
  %v1407 = vunpack.c.l.b16 %v383
  %v1408 = vunpack.c.l.b16 %v384
  %v1409 = vunpack.c.l.b16 %v385
  %v1410 = vunpack.c.l.b16 %v386
  %v1411 = vunpack.c.l.b16 %v387
  %v1412 = vunpack.c.l.b16 %v388
  %v1413 = vunpack.c.l.b16 %v389
  %v1414 = vunpack.c.l.b16 %v390
  %v1415 = vunpack.c.l.b16 %v391
  %v1416 = vunpack.c.l.b16 %v392
  %v1417 = vunpack.c.l.b16 %v393
  %v1418 = vunpack.c.l.b16 %v394
  %v1419 = vunpack.c.l.b16 %v395
  %v1420 = vunpack.c.l.b16 %v396
  %v1421 = vunpack.c.l.b16 %v397
  %v1422 = vunpack.c.l.b16 %v398
  %v1423 = vunpack.c.l.b16 %v399
  %v1424 = vunpack.c.l.b16 %v400
  %v1425 = vunpack.c.l.b16 %v401
  %v1426 = vunpack.c.l.b16 %v402
  %v1427 = vunpack.c.l.b16 %v403
  %v1428 = vunpack.c.l.b16 %v404
  %v1429 = vunpack.c.l.b16 %v405
  %v1430 = vunpack.c.l.b16 %v406
  %v1431 = vunpack.c.l.b16 %v407
  %v1432 = vunpack.c.l.b16 %v408
  %v1433 = vunpack.c.l.b16 %v409
  %v1434 = vunpack.c.l.b16 %v410
  %v1435 = vunpack.c.l.b16 %v411
  %v1436 = vunpack.c.l.b16 %v412
  %v1437 = vunpack.c.l.b16 %v413
  %v1438 = vunpack.c.l.b16 %v414
  %v1439 = vunpack.c.l.b16 %v415
  %v1440 = vunpack.c.l.b16 %v416
  %v1441 = vunpack.c.l.b16 %v417
  %v1442 = vunpack.c.l.b16 %v418
  %v1443 = vunpack.c.l.b16 %v419
  %v1444 = vunpack.c.l.b16 %v420
  %v1445 = vunpack.c.l.b16 %v421
  %v1446 = vunpack.c.l.b16 %v422
  %v1447 = vunpack.c.l.b16 %v423
  %v1448 = vunpack.c.l.b16 %v424
  %v1449 = vunpack.c.l.b16 %v425
  %v1450 = vunpack.c.l.b16 %v426
  %v1451 = vunpack.c.l.b16 %v427
  %v1452 = vunpack.c.l.b16 %v428
  %v1453 = vunpack.c.l.b16 %v429
  %v1454 = vunpack.c.l.b16 %v430
  %v1455 = vunpack.c.l.b16 %v431
  %v1456 = vunpack.c.l.b16 %v432
  %v1457 = vunpack.c.l.b16 %v433
  %v1458 = vunpack.c.l.b16 %v434
  %v1459 = vunpack.c.l.b16 %v435
  %v1460 = vunpack.c.l.b16 %v436
  %v1461 = vunpack.c.l.b16 %v437
  %v1462 = vunpack.c.l.b16 %v438
  %v1463 = vunpack.c.l.b16 %v439
  %v1464 = vunpack.c.l.b16 %v440
  %v1465 = vunpack.c.l.b16 %v441
  %v1466 = vunpack.c.l.b16 %v442
  %v1467 = vunpack.c.l.b16 %v443
  %v1468 = vunpack.c.l.b16 %v444
  %v1469 = vunpack.c.l.b16 %v445
  %v1470 = vunpack.c.l.b16 %v446
  %v1471 = vunpack.c.l.b16 %v447
  %v1472 = vunpack.c.l.b16 %v448
  %v1473 = vunpack.c.l.b16 %v449
  %v1474 = vunpack.c.l.b16 %v450
  %v1475 = vunpack.c.l.b16 %v451
  %v1476 = vunpack.c.l.b16 %v452
  %v1477 = vunpack.c.l.b16 %v453
  %v1478 = vunpack.c.l.b16 %v454
  %v1479 = vunpack.c.l.b16 %v455
  %v1480 = vunpack.c.l.b16 %v456
  %v1481 = vunpack.c.l.b16 %v457
  %v1482 = vunpack.c.l.b16 %v458
  %v1483 = vunpack.c.l.b16 %v459
  %v1484 = vunpack.c.l.b16 %v460
  %v1485 = vunpack.c.l.b16 %v461
  %v1486 = vunpack.c.l.b16 %v462
  %v1487 = vunpack.c.l.b16 %v463
  %v1488 = vunpack.c.l.b16 %v464
  %v1489 = vunpack.c.l.b16 %v465
  %v1490 = vunpack.c.l.b16 %v466
  %v1491 = vunpack.c.l.b16 %v467
  %v1492 = vunpack.c.l.b16 %v468
  %v1493 = vunpack.c.l.b16 %v469
  %v1494 = vunpack.c.l.b16 %v470
  %v1495 = vunpack.c.l.b16 %v471
  %v1496 = vunpack.c.l.b16 %v472
  %v1497 = vunpack.c.l.b16 %v473
  %v1498 = vunpack.c.l.b16 %v474
  %v1499 = vunpack.c.l.b16 %v475
  %v1500 = vunpack.c.l.b16 %v476
  %v1501 = vunpack.c.l.b16 %v477
  %v1502 = vunpack.c.l.b16 %v478
  %v1503 = vunpack.c.l.b16 %v479
  %v1504 = vunpack.c.l.b16 %v480
  %v1505 = vunpack.c.l.b16 %v481
  %v1506 = vunpack.c.l.b16 %v482
  %v1507 = vunpack.c.l.b16 %v483
  %v1508 = vunpack.c.l.b16 %v484
  %v1509 = vunpack.c.l.b16 %v485
  %v1510 = vunpack.c.l.b16 %v486
  %v1511 = vunpack.c.l.b16 %v487
  %v1512 = vunpack.c.l.b16 %v488
  %v1513 = vunpack.c.l.b16 %v489
  %v1514 = vunpack.c.l.b16 %v490
  %v1515 = vunpack.c.l.b16 %v491
  %v1516 = vunpack.c.l.b16 %v492
  %v1517 = vunpack.c.l.b16 %v493
  %v1518 = vunpack.c.l.b16 %v494
  %v1519 = vunpack.c.l.b16 %v495
  %v1520 = vunpack.c.l.b16 %v496
  %v1521 = vunpack.c.l.b16 %v497
  %v1522 = vunpack.c.l.b16 %v498
  %v1523 = vunpack.c.l.b16 %v499
  %v1524 = vunpack.c.l.b16 %v500
  %v1525 = vunpack.c.l.b16 %v501
  %v1526 = vunpack.c.l.b16 %v502
  %v1527 = vunpack.c.l.b16 %v503
  %v1528 = vunpack.c.l.b16 %v504
  %v1529 = vunpack.c.l.b16 %v505
  %v1530 = vunpack.c.l.b16 %v506
  %v1531 = vunpack.c.l.b16 %v507
  %v1532 = vunpack.c.l.b16 %v508
  %v1533 = vunpack.c.l.b16 %v509
  %v1534 = vunpack.c.l.b16 %v510
  %v1535 = vunpack.c.l.b16 %v511
  %v1536 = vunpack.c.l.b16 %v512
  %v1537 = vunpack.c.l.b16 %v513
  %v1538 = vunpack.c.l.b16 %v514
  %v1539 = vunpack.c.l.b16 %v515
  %v1540 = vunpack.c.l.b16 %v516
  %v1541 = vunpack.c.l.b16 %v517
  %v1542 = vunpack.c.l.b16 %v518
  %v1543 = vunpack.c.l.b16 %v519
  %v1544 = vunpack.c.l.b16 %v520
  %v1545 = vunpack.c.l.b16 %v521
  %v1546 = vunpack.c.l.b16 %v522
  %v1547 = vunpack.c.l.b16 %v523
  %v1548 = vunpack.c.l.b16 %v524
  %v1549 = vunpack.c.l.b16 %v525
  %v1550 = vunpack.c.l.b16 %v526
  %v1551 = vunpack.c.l.b16 %v527
  %v1552 = vunpack.c.l.b16 %v528
  %v1553 = vunpack.c.l.b16 %v529
  %v1554 = vunpack.c.l.b16 %v530
  %v1555 = vunpack.c.l.b16 %v531
  %v1556 = vunpack.c.l.b16 %v532
  %v1557 = vunpack.c.l.b16 %v533
  %v1558 = vunpack.c.l.b16 %v534
  %v1559 = vunpack.c.l.b16 %v535
  %v1560 = vunpack.c.l.b16 %v536
  %v1561 = vunpack.c.l.b16 %v537
  %v1562 = vunpack.c.l.b16 %v538
  %v1563 = vunpack.c.l.b16 %v539
  %v1564 = vunpack.c.l.b16 %v540
  %v1565 = vunpack.c.l.b16 %v541
  %v1566 = vunpack.c.l.b16 %v542
  %v1567 = vunpack.c.l.b16 %v543
  %v1568 = vunpack.c.l.b16 %v544
  %v1569 = vunpack.c.l.b16 %v545
  %v1570 = vunpack.c.l.b16 %v546
  %v1571 = vunpack.c.l.b16 %v547
  %v1572 = vunpack.c.l.b16 %v548
  %v1573 = vunpack.c.l.b16 %v549
  %v1574 = vunpack.c.l.b16 %v550
  %v1575 = vunpack.c.l.b16 %v551
  %v1576 = vunpack.c.l.b16 %v552
  %v1577 = vunpack.c.l.b16 %v553
  %v1578 = vunpack.c.l.b16 %v554
  %v1579 = vunpack.c.l.b16 %v555
  %v1580 = vunpack.c.l.b16 %v556
  %v1581 = vunpack.c.l.b16 %v557
  %v1582 = vunpack.c.l.b16 %v558
  %v1583 = vunpack.c.l.b16 %v559
  %v1584 = vunpack.c.l.b16 %v560
  %v1585 = vunpack.c.l.b16 %v561
  %v1586 = vunpack.c.l.b16 %v562
  %v1587 = vunpack.c.l.b16 %v563
  %v1588 = vunpack.c.l.b16 %v564
  %v1589 = vunpack.c.l.b16 %v565
  %v1590 = vunpack.c.l.b16 %v566
  %v1591 = vunpack.c.l.b16 %v567
  %v1592 = vunpack.c.l.b16 %v568
  %v1593 = vunpack.c.l.b16 %v569
  %v1594 = vunpack.c.l.b16 %v570
  %v1595 = vunpack.c.l.b16 %v571
  %v1596 = vunpack.c.l.b16 %v572
  %v1597 = vunpack.c.l.b16 %v573
  %v1598 = vunpack.c.l.b16 %v574
  %v1599 = vunpack.c.l.b16 %v575
  %v1600 = vunpack.c.l.b16 %v576
  %v1601 = vunpack.c.l.b16 %v577
  %v1602 = vunpack.c.l.b16 %v578
  %v1603 = vunpack.c.l.b16 %v579
  %v1604 = vunpack.c.l.b16 %v580
  %v1605 = vunpack.c.l.b16 %v581
  %v1606 = vunpack.c.l.b16 %v582
  %v1607 = vunpack.c.l.b16 %v583
  %v1608 = vunpack.c.l.b16 %v584
  %v1609 = vunpack.c.l.b16 %v585
  %v1610 = vunpack.c.l.b16 %v586
  %v1611 = vunpack.c.l.b16 %v587
  %v1612 = vunpack.c.l.b16 %v588
  %v1613 = vunpack.c.l.b16 %v589
  %v1614 = vunpack.c.l.b16 %v590
  %v1615 = vunpack.c.l.b16 %v591
  %v1616 = vunpack.c.l.b16 %v592
  %v1617 = vunpack.c.l.b16 %v593
  %v1618 = vunpack.c.l.b16 %v594
  %v1619 = vunpack.c.l.b16 %v595
  %v1620 = vunpack.c.l.b16 %v596
  %v1621 = vunpack.c.l.b16 %v597
  %v1622 = vunpack.c.l.b16 %v598
  %v1623 = vunpack.c.l.b16 %v599
  %v1624 = vunpack.c.l.b16 %v600
  %v1625 = vunpack.c.l.b16 %v601
  %v1626 = vunpack.c.l.b16 %v602
  %v1627 = vunpack.c.l.b16 %v603
  %v1628 = vunpack.c.l.b16 %v604
  %v1629 = vunpack.c.l.b16 %v605
  %v1630 = vunpack.c.l.b16 %v606
  %v1631 = vunpack.c.l.b16 %v607
  %v1632 = vunpack.c.l.b16 %v608
  %v1633 = vunpack.c.l.b16 %v609
  %v1634 = vunpack.c.l.b16 %v610
  %v1635 = vunpack.c.l.b16 %v611
  %v1636 = vunpack.c.l.b16 %v612
  %v1637 = vunpack.c.l.b16 %v613
  %v1638 = vunpack.c.l.b16 %v614
  %v1639 = vunpack.c.l.b16 %v615
  %v1640 = vunpack.c.l.b16 %v616
  %v1641 = vunpack.c.l.b16 %v617
  %v1642 = vunpack.c.l.b16 %v618
  %v1643 = vunpack.c.l.b16 %v619
  %v1644 = vunpack.c.l.b16 %v620
  %v1645 = vunpack.c.l.b16 %v621
  %v1646 = vunpack.c.l.b16 %v622
  %v1647 = vunpack.c.l.b16 %v623
  %v1648 = vunpack.c.l.b16 %v624
  %v1649 = vunpack.c.l.b16 %v625
  %v1650 = vunpack.c.l.b16 %v626
  %v1651 = vunpack.c.l.b16 %v627
  %v1652 = vunpack.c.l.b16 %v628
  %v1653 = vunpack.c.l.b16 %v629
  %v1654 = vunpack.c.l.b16 %v630
  %v1655 = vunpack.c.l.b16 %v631
  %v1656 = vunpack.c.l.b16 %v632
  %v1657 = vunpack.c.l.b16 %v633
  %v1658 = vunpack.c.l.b16 %v634
  %v1659 = vunpack.c.l.b16 %v635
  %v1660 = vunpack.c.l.b16 %v636
  %v1661 = vunpack.c.l.b16 %v637
  %v1662 = vunpack.c.l.b16 %v638
  %v1663 = vunpack.c.l.b16 %v639
  %v1664 = vunpack.c.l.b16 %v640
  %v1665 = vunpack.c.l.b16 %v641
  %v1666 = vunpack.c.l.b16 %v642
  %v1667 = vunpack.c.l.b16 %v643
  %v1668 = vunpack.c.l.b16 %v644
  %v1669 = vunpack.c.l.b16 %v645
  %v1670 = vunpack.c.l.b16 %v646
  %v1671 = vunpack.c.l.b16 %v647
  %v1672 = vunpack.c.l.b16 %v648
  %v1673 = vunpack.c.l.b16 %v649
  %v1674 = vunpack.c.l.b16 %v650
  %v1675 = vunpack.c.l.b16 %v651
  %v1676 = vunpack.c.l.b16 %v652
  %v1677 = vunpack.c.l.b16 %v653
  %v1678 = vunpack.c.l.b16 %v654
  %v1679 = vunpack.c.l.b16 %v655
  %v1680 = vunpack.c.l.b16 %v656
  %v1681 = vunpack.c.l.b16 %v657
  %v1682 = vunpack.c.l.b16 %v658
  %v1683 = vunpack.c.l.b16 %v659
  %v1684 = vunpack.c.l.b16 %v660
  %v1685 = vunpack.c.l.b16 %v661
  %v1686 = vunpack.c.l.b16 %v662
  %v1687 = vunpack.c.l.b16 %v663
  %v1688 = vunpack.c.l.b16 %v664
  %v1689 = vunpack.c.l.b16 %v665
  %v1690 = vunpack.c.l.b16 %v666
  %v1691 = vunpack.c.l.b16 %v667
  %v1692 = vunpack.c.l.b16 %v668
  %v1693 = vunpack.c.l.b16 %v669
  %v1694 = vunpack.c.l.b16 %v670
  %v1695 = vunpack.c.l.b16 %v671
  %v1696 = vunpack.c.l.b16 %v672
  %v1697 = vunpack.c.l.b16 %v673
  %v1698 = vunpack.c.l.b16 %v674
  %v1699 = vunpack.c.l.b16 %v675
  %v1700 = vunpack.c.l.b16 %v676
  %v1701 = vunpack.c.l.b16 %v677
  %v1702 = vunpack.c.l.b16 %v678
  %v1703 = vunpack.c.l.b16 %v679
  %v1704 = vunpack.c.l.b16 %v680
  %v1705 = vunpack.c.l.b16 %v681
  %v1706 = vunpack.c.l.b16 %v682
  %v1707 = vunpack.c.l.b16 %v683
  %v1708 = vunpack.c.l.b16 %v684
  %v1709 = vunpack.c.l.b16 %v685
  %v1710 = vunpack.c.l.b16 %v686
  %v1711 = vunpack.c.l.b16 %v687
  %v1712 = vunpack.c.l.b16 %v688
  %v1713 = vunpack.c.l.b16 %v689
  %v1714 = vunpack.c.l.b16 %v690
  %v1715 = vunpack.c.l.b16 %v691
  %v1716 = vunpack.c.l.b16 %v692
  %v1717 = vunpack.c.l.b16 %v693
  %v1718 = vunpack.c.l.b16 %v694
  %v1719 = vunpack.c.l.b16 %v695
  %v1720 = vunpack.c.l.b16 %v696
  %v1721 = vunpack.c.l.b16 %v697
  %v1722 = vunpack.c.l.b16 %v698
  %v1723 = vunpack.c.l.b16 %v699
  %v1724 = vunpack.c.l.b16 %v700
  %v1725 = vunpack.c.l.b16 %v701
  %v1726 = vunpack.c.l.b16 %v702
  %v1727 = vunpack.c.l.b16 %v703
  %v1728 = vunpack.c.l.b16 %v704
  %v1729 = vunpack.c.l.b16 %v705
  %v1730 = vunpack.c.l.b16 %v706
  %v1731 = vunpack.c.l.b16 %v707
  %v1732 = vunpack.c.l.b16 %v708
  %v1733 = vunpack.c.l.b16 %v709
  %v1734 = vunpack.c.l.b16 %v710
  %v1735 = vunpack.c.l.b16 %v711
  %v1736 = vunpack.c.l.b16 %v712
  %v1737 = vunpack.c.l.b16 %v713
  %v1738 = vunpack.c.l.b16 %v714
  %v1739 = vunpack.c.l.b16 %v715
  %v1740 = vunpack.c.l.b16 %v716
  %v1741 = vunpack.c.l.b16 %v717
  %v1742 = vunpack.c.l.b16 %v718
  %v1743 = vunpack.c.l.b16 %v719
  %v1744 = vunpack.c.l.b16 %v720
  %v1745 = vunpack.c.l.b16 %v721
  %v1746 = vunpack.c.l.b16 %v722
  %v1747 = vunpack.c.l.b16 %v723
  %v1748 = vunpack.c.l.b16 %v724
  %v1749 = vunpack.c.l.b16 %v725
  %v1750 = vunpack.c.l.b16 %v726
  %v1751 = vunpack.c.l.b16 %v727
  %v1752 = vunpack.c.l.b16 %v728
  %v1753 = vunpack.c.l.b16 %v729
  %v1754 = vunpack.c.l.b16 %v730
  %v1755 = vunpack.c.l.b16 %v731
  %v1756 = vunpack.c.l.b16 %v732
  %v1757 = vunpack.c.l.b16 %v733
  %v1758 = vunpack.c.l.b16 %v734
  %v1759 = vunpack.c.l.b16 %v735
  %v1760 = vunpack.c.l.b16 %v736
  %v1761 = vunpack.c.l.b16 %v737
  %v1762 = vunpack.c.l.b16 %v738
  %v1763 = vunpack.c.l.b16 %v739
  %v1764 = vunpack.c.l.b16 %v740
  %v1765 = vunpack.c.l.b16 %v741
  %v1766 = vpack.c.b16 %v1255, %v1254
  %v1767 = vpack.c.b16 %v1257, %v1256
  %v1768 = vpack.c.b16 %v1259, %v1258
  %v1769 = vpack.c.b16 %v1261, %v1260
  %v1770 = vpack.c.b16 %v1263, %v1262
  %v1771 = vpack.c.b16 %v1265, %v1264
  %v1772 = vpack.c.b16 %v1267, %v1266
  %v1773 = vpack.c.b16 %v1269, %v1268
  %v1774 = vpack.c.b16 %v1271, %v1270
  %v1775 = vpack.c.b16 %v1273, %v1272
  %v1776 = vpack.c.b16 %v1275, %v1274
  %v1777 = vpack.c.b16 %v1277, %v1276
  %v1778 = vpack.c.b16 %v1279, %v1278
  %v1779 = vpack.c.b16 %v1281, %v1280
  %v1780 = vpack.c.b16 %v1283, %v1282
  %v1781 = vpack.c.b16 %v1285, %v1284
  %v1782 = vpack.c.b16 %v1287, %v1286
  %v1783 = vpack.c.b16 %v1289, %v1288
  %v1784 = vpack.c.b16 %v1291, %v1290
  %v1785 = vpack.c.b16 %v1293, %v1292
  %v1786 = vpack.c.b16 %v1295, %v1294
  %v1787 = vpack.c.b16 %v1297, %v1296
  %v1788 = vpack.c.b16 %v1299, %v1298
  %v1789 = vpack.c.b16 %v1301, %v1300
  %v1790 = vpack.c.b16 %v1303, %v1302
  %v1791 = vpack.c.b16 %v1305, %v1304
  %v1792 = vpack.c.b16 %v1307, %v1306
  %v1793 = vpack.c.b16 %v1309, %v1308
  %v1794 = vpack.c.b16 %v1311, %v1310
  %v1795 = vpack.c.b16 %v1313, %v1312
  %v1796 = vpack.c.b16 %v1315, %v1314
  %v1797 = vpack.c.b16 %v1317, %v1316
  %v1798 = vpack.c.b16 %v1319, %v1318
  %v1799 = vpack.c.b16 %v1321, %v1320
  %v1800 = vpack.c.b16 %v1323, %v1322
  %v1801 = vpack.c.b16 %v1325, %v1324
  %v1802 = vpack.c.b16 %v1327, %v1326
  %v1803 = vpack.c.b16 %v1329, %v1328
  %v1804 = vpack.c.b16 %v1331, %v1330
  %v1805 = vpack.c.b16 %v1333, %v1332
  %v1806 = vpack.c.b16 %v1335, %v1334
  %v1807 = vpack.c.b16 %v1337, %v1336
  %v1808 = vpack.c.b16 %v1339, %v1338
  %v1809 = vpack.c.b16 %v1341, %v1340
  %v1810 = vpack.c.b16 %v1343, %v1342
  %v1811 = vpack.c.b16 %v1345, %v1344
  %v1812 = vpack.c.b16 %v1347, %v1346
  %v1813 = vpack.c.b16 %v1349, %v1348
  %v1814 = vpack.c.b16 %v1351, %v1350
  %v1815 = vpack.c.b16 %v1353, %v1352
  %v1816 = vpack.c.b16 %v1355, %v1354
  %v1817 = vpack.c.b16 %v1357, %v1356
  %v1818 = vpack.c.b16 %v1359, %v1358
  %v1819 = vpack.c.b16 %v1361, %v1360
  %v1820 = vpack.c.b16 %v1363, %v1362
  %v1821 = vpack.c.b16 %v1365, %v1364
  %v1822 = vpack.c.b16 %v1367, %v1366
  %v1823 = vpack.c.b16 %v1369, %v1368
  %v1824 = vpack.c.b16 %v1371, %v1370
  %v1825 = vpack.c.b16 %v1373, %v1372
  %v1826 = vpack.c.b16 %v1375, %v1374
  %v1827 = vpack.c.b16 %v1377, %v1376
  %v1828 = vpack.c.b16 %v1379, %v1378
  %v1829 = vpack.c.b16 %v1381, %v1380
  %v1830 = vpack.c.b16 %v1383, %v1382
  %v1831 = vpack.c.b16 %v1385, %v1384
  %v1832 = vpack.c.b16 %v1387, %v1386
  %v1833 = vpack.c.b16 %v1389, %v1388
  %v1834 = vpack.c.b16 %v1391, %v1390
  %v1835 = vpack.c.b16 %v1393, %v1392
  %v1836 = vpack.c.b16 %v1395, %v1394
  %v1837 = vpack.c.b16 %v1397, %v1396
  %v1838 = vpack.c.b16 %v1399, %v1398
  %v1839 = vpack.c.b16 %v1401, %v1400
  %v1840 = vpack.c.b16 %v1403, %v1402
  %v1841 = vpack.c.b16 %v1405, %v1404
  %v1842 = vpack.c.b16 %v1407, %v1406
  %v1843 = vpack.c.b16 %v1409, %v1408
  %v1844 = vpack.c.b16 %v1411, %v1410
  %v1845 = vpack.c.b16 %v1413, %v1412
  %v1846 = vpack.c.b16 %v1415, %v1414
  %v1847 = vpack.c.b16 %v1417, %v1416
  %v1848 = vpack.c.b16 %v1419, %v1418
  %v1849 = vpack.c.b16 %v1421, %v1420
  %v1850 = vpack.c.b16 %v1423, %v1422
  %v1851 = vpack.c.b16 %v1425, %v1424
  %v1852 = vpack.c.b16 %v1427, %v1426
  %v1853 = vpack.c.b16 %v1429, %v1428
  %v1854 = vpack.c.b16 %v1431, %v1430
  %v1855 = vpack.c.b16 %v1433, %v1432
  %v1856 = vpack.c.b16 %v1435, %v1434
  %v1857 = vpack.c.b16 %v1437, %v1436
  %v1858 = vpack.c.b16 %v1439, %v1438
  %v1859 = vpack.c.b16 %v1441, %v1440
  %v1860 = vpack.c.b16 %v1443, %v1442
  %v1861 = vpack.c.b16 %v1445, %v1444
  %v1862 = vpack.c.b16 %v1447, %v1446
  %v1863 = vpack.c.b16 %v1449, %v1448
  %v1864 = vpack.c.b16 %v1451, %v1450
  %v1865 = vpack.c.b16 %v1453, %v1452
  %v1866 = vpack.c.b16 %v1455, %v1454
  %v1867 = vpack.c.b16 %v1457, %v1456
  %v1868 = vpack.c.b16 %v1459, %v1458
  %v1869 = vpack.c.b16 %v1461, %v1460
  %v1870 = vpack.c.b16 %v1463, %v1462
  %v1871 = vpack.c.b16 %v1465, %v1464
  %v1872 = vpack.c.b16 %v1467, %v1466
  %v1873 = vpack.c.b16 %v1469, %v1468
  %v1874 = vpack.c.b16 %v1471, %v1470
  %v1875 = vpack.c.b16 %v1473, %v1472
  %v1876 = vpack.c.b16 %v1475, %v1474
  %v1877 = vpack.c.b16 %v1477, %v1476
  %v1878 = vpack.c.b16 %v1479, %v1478
  %v1879 = vpack.c.b16 %v1481, %v1480
  %v1880 = vpack.c.b16 %v1483, %v1482
  %v1881 = vpack.c.b16 %v1485, %v1484
  %v1882 = vpack.c.b16 %v1487, %v1486
  %v1883 = vpack.c.b16 %v1489, %v1488
  %v1884 = vpack.c.b16 %v1491, %v1490
  %v1885 = vpack.c.b16 %v1493, %v1492
  %v1886 = vpack.c.b16 %v1495, %v1494
  %v1887 = vpack.c.b16 %v1497, %v1496
  %v1888 = vpack.c.b16 %v1499, %v1498
  %v1889 = vpack.c.b16 %v1501, %v1500
  %v1890 = vpack.c.b16 %v1503, %v1502
  %v1891 = vpack.c.b16 %v1505, %v1504
  %v1892 = vpack.c.b16 %v1507, %v1506
  %v1893 = vpack.c.b16 %v1509, %v1508
  %v1894 = vpack.c.b16 %v1511, %v1510
  %v1895 = vpack.c.b16 %v1513, %v1512
  %v1896 = vpack.c.b16 %v1515, %v1514
  %v1897 = vpack.c.b16 %v1517, %v1516
  %v1898 = vpack.c.b16 %v1519, %v1518
  %v1899 = vpack.c.b16 %v1521, %v1520
  %v1900 = vpack.c.b16 %v1523, %v1522
  %v1901 = vpack.c.b16 %v1525, %v1524
  %v1902 = vpack.c.b16 %v1527, %v1526
  %v1903 = vpack.c.b16 %v1529, %v1528
  %v1904 = vpack.c.b16 %v1531, %v1530
  %v1905 = vpack.c.b16 %v1533, %v1532
  %v1906 = vpack.c.b16 %v1535, %v1534
  %v1907 = vpack.c.b16 %v1537, %v1536
  %v1908 = vpack.c.b16 %v1539, %v1538
  %v1909 = vpack.c.b16 %v1541, %v1540
  %v1910 = vpack.c.b16 %v1543, %v1542
  %v1911 = vpack.c.b16 %v1545, %v1544
  %v1912 = vpack.c.b16 %v1547, %v1546
  %v1913 = vpack.c.b16 %v1549, %v1548
  %v1914 = vpack.c.b16 %v1551, %v1550
  %v1915 = vpack.c.b16 %v1553, %v1552
  %v1916 = vpack.c.b16 %v1555, %v1554
  %v1917 = vpack.c.b16 %v1557, %v1556
  %v1918 = vpack.c.b16 %v1559, %v1558
  %v1919 = vpack.c.b16 %v1561, %v1560
  %v1920 = vpack.c.b16 %v1563, %v1562
  %v1921 = vpack.c.b16 %v1565, %v1564
  %v1922 = vpack.c.b16 %v1567, %v1566
  %v1923 = vpack.c.b16 %v1569, %v1568
  %v1924 = vpack.c.b16 %v1571, %v1570
  %v1925 = vpack.c.b16 %v1573, %v1572
  %v1926 = vpack.c.b16 %v1575, %v1574
  %v1927 = vpack.c.b16 %v1577, %v1576
  %v1928 = vpack.c.b16 %v1579, %v1578
  %v1929 = vpack.c.b16 %v1581, %v1580
  %v1930 = vpack.c.b16 %v1583, %v1582
  %v1931 = vpack.c.b16 %v1585, %v1584
  %v1932 = vpack.c.b16 %v1587, %v1586
  %v1933 = vpack.c.b16 %v1589, %v1588
  %v1934 = vpack.c.b16 %v1591, %v1590
  %v1935 = vpack.c.b16 %v1593, %v1592
  %v1936 = vpack.c.b16 %v1595, %v1594
  %v1937 = vpack.c.b16 %v1597, %v1596
  %v1938 = vpack.c.b16 %v1599, %v1598
  %v1939 = vpack.c.b16 %v1601, %v1600
  %v1940 = vpack.c.b16 %v1603, %v1602
  %v1941 = vpack.c.b16 %v1605, %v1604
  %v1942 = vpack.c.b16 %v1607, %v1606
  %v1943 = vpack.c.b16 %v1609, %v1608
  %v1944 = vpack.c.b16 %v1611, %v1610
  %v1945 = vpack.c.b16 %v1613, %v1612
  %v1946 = vpack.c.b16 %v1615, %v1614
  %v1947 = vpack.c.b16 %v1617, %v1616
  %v1948 = vpack.c.b16 %v1619, %v1618
  %v1949 = vpack.c.b16 %v1621, %v1620
  %v1950 = vpack.c.b16 %v1623, %v1622
  %v1951 = vpack.c.b16 %v1625, %v1624
  %v1952 = vpack.c.b16 %v1627, %v1626
  %v1953 = vpack.c.b16 %v1629, %v1628
  %v1954 = vpack.c.b16 %v1631, %v1630
  %v1955 = vpack.c.b16 %v1633, %v1632
  %v1956 = vpack.c.b16 %v1635, %v1634
  %v1957 = vpack.c.b16 %v1637, %v1636
  %v1958 = vpack.c.b16 %v1639, %v1638
  %v1959 = vpack.c.b16 %v1641, %v1640
  %v1960 = vpack.c.b16 %v1643, %v1642
  %v1961 = vpack.c.b16 %v1645, %v1644
  %v1962 = vpack.c.b16 %v1647, %v1646
  %v1963 = vpack.c.b16 %v1649, %v1648
  %v1964 = vpack.c.b16 %v1651, %v1650
  %v1965 = vpack.c.b16 %v1653, %v1652
  %v1966 = vpack.c.b16 %v1655, %v1654
  %v1967 = vpack.c.b16 %v1657, %v1656
  %v1968 = vpack.c.b16 %v1659, %v1658
  %v1969 = vpack.c.b16 %v1661, %v1660
  %v1970 = vpack.c.b16 %v1663, %v1662
  %v1971 = vpack.c.b16 %v1665, %v1664
  %v1972 = vpack.c.b16 %v1667, %v1666
  %v1973 = vpack.c.b16 %v1669, %v1668
  %v1974 = vpack.c.b16 %v1671, %v1670
  %v1975 = vpack.c.b16 %v1673, %v1672
  %v1976 = vpack.c.b16 %v1675, %v1674
  %v1977 = vpack.c.b16 %v1677, %v1676
  %v1978 = vpack.c.b16 %v1679, %v1678
  %v1979 = vpack.c.b16 %v1681, %v1680
  %v1980 = vpack.c.b16 %v1683, %v1682
  %v1981 = vpack.c.b16 %v1685, %v1684
  %v1982 = vpack.c.b16 %v1687, %v1686
  %v1983 = vpack.c.b16 %v1689, %v1688
  %v1984 = vpack.c.b16 %v1691, %v1690
  %v1985 = vpack.c.b16 %v1693, %v1692
  %v1986 = vpack.c.b16 %v1695, %v1694
  %v1987 = vpack.c.b16 %v1697, %v1696
  %v1988 = vpack.c.b16 %v1699, %v1698
  %v1989 = vpack.c.b16 %v1701, %v1700
  %v1990 = vpack.c.b16 %v1703, %v1702
  %v1991 = vpack.c.b16 %v1705, %v1704
  %v1992 = vpack.c.b16 %v1707, %v1706
  %v1993 = vpack.c.b16 %v1709, %v1708
  %v1994 = vpack.c.b16 %v1711, %v1710
  %v1995 = vpack.c.b16 %v1713, %v1712
  %v1996 = vpack.c.b16 %v1715, %v1714
  %v1997 = vpack.c.b16 %v1717, %v1716
  %v1998 = vpack.c.b16 %v1719, %v1718
  %v1999 = vpack.c.b16 %v1721, %v1720
  %v2000 = vpack.c.b16 %v1723, %v1722
  %v2001 = vpack.c.b16 %v1725, %v1724
  %v2002 = vpack.c.b16 %v1727, %v1726
  %v2003 = vpack.c.b16 %v1729, %v1728
  %v2004 = vpack.c.b16 %v1731, %v1730
  %v2005 = vpack.c.b16 %v1733, %v1732
  %v2006 = vpack.c.b16 %v1735, %v1734
  %v2007 = vpack.c.b16 %v1737, %v1736
  %v2008 = vpack.c.b16 %v1739, %v1738
  %v2009 = vpack.c.b16 %v1741, %v1740
  %v2010 = vpack.c.b16 %v1743, %v1742
  %v2011 = vpack.c.b16 %v1745, %v1744
  %v2012 = vpack.c.b16 %v1747, %v1746
  %v2013 = vpack.c.b16 %v1749, %v1748
  %v2014 = vpack.c.b16 %v1751, %v1750
  %v2015 = vpack.c.b16 %v1753, %v1752
  %v2016 = vpack.c.b16 %v1755, %v1754
  %v2017 = vpack.c.b16 %v1757, %v1756
  %v2018 = vpack.c.b16 %v1759, %v1758
  %v2019 = vpack.c.b16 %v1761, %v1760
  %v2020 = vpack.c.b16 %v1763, %v1762
  %v2021 = vpack.c.b16 %v1765, %v1764
  %2278 = vmatprep.subr.bf16.mxu0 0
  %2279 = vmatpush1.bf16.msra.mxu0 %v1773
  %2280 = vmatprep.subr.bf16.mxu0 0
  %2281 = vmatpush1.bf16.msra.mxu0 %v1772
  %2282 = vmatprep.subr.bf16.mxu0 0
  %2283 = vmatpush1.bf16.msra.mxu0 %v1771
  %2284 = vmatprep.subr.bf16.mxu0 0
  %2285 = vmatpush1.bf16.msra.mxu0 %v1770
  %2286 = vmatprep.subr.bf16.mxu0 0
  %2287 = vmatpush1.bf16.msra.mxu0 %v1769
  %2288 = vmatprep.subr.bf16.mxu0 0
  %2289 = vmatpush1.bf16.msra.mxu0 %v1768
  %2290 = vmatprep.subr.bf16.mxu0 0
  %2291 = vmatpush1.bf16.msra.mxu0 %v1767
  %2292 = vmatprep.subr.bf16.mxu0 0
  %2293 = vmatpush1.bf16.msra.mxu0 %v1766
  %2294 = vmatprep.subr.bf16.mxu0 0
  %2295 = vmatpush2.bf16.msra.mxu0 %v1781
  %2296 = vmatprep.subr.bf16.mxu0 0
  %2297 = vmatpush2.bf16.msra.mxu0 %v1780
  %2298 = vmatprep.subr.bf16.mxu0 0
  %2299 = vmatpush2.bf16.msra.mxu0 %v1779
  %2300 = vmatprep.subr.bf16.mxu0 0
  %2301 = vmatpush2.bf16.msra.mxu0 %v1778
  %2302 = vmatprep.subr.bf16.mxu0 0
  %2303 = vmatpush2.bf16.msra.mxu0 %v1777
  %2304 = vmatprep.subr.bf16.mxu0 0
  %2305 = vmatpush2.bf16.msra.mxu0 %v1776
  %2306 = vmatprep.subr.bf16.mxu0 0
  %2307 = vmatpush2.bf16.msra.mxu0 %v1775
  %2308 = vmatprep.subr.bf16.mxu0 0
  %2309 = vmatpush2.bf16.msra.mxu0 %v1774
  %2310 = vmatprep.mubr.bf16.mxu0 %v199
  %2311 = vmatmul.mubr.bf16.gmra.mxu0 %v198
  %v2312 = vpop.f32.mrf.mxu0
  %v2313 = vadd.f32 0.0, %v2312
  %v2314 = vpop.f32.mrf.mxu0
  %v2315 = vpop.f32.mrf.mxu0
  %v2316 = vpop.f32.mrf.mxu0
  %2317 = vdwg.mxu0
  %2318 = vmatprep.subr.bf16.mxu0 0
  %2319 = vmatpush1.bf16.msra.mxu0 %v1789
  %2320 = vmatprep.subr.bf16.mxu0 0
  %2321 = vmatpush1.bf16.msra.mxu0 %v1788
  %2322 = vmatprep.subr.bf16.mxu0 0
  %2323 = vmatpush1.bf16.msra.mxu0 %v1787
  %2324 = vmatprep.subr.bf16.mxu0 0
  %2325 = vmatpush1.bf16.msra.mxu0 %v1786
  %2326 = vmatprep.subr.bf16.mxu0 0
  %2327 = vmatpush1.bf16.msra.mxu0 %v1785
  %2328 = vmatprep.subr.bf16.mxu0 0
  %2329 = vmatpush1.bf16.msra.mxu0 %v1784
  %2330 = vmatprep.subr.bf16.mxu0 0
  %2331 = vmatpush1.bf16.msra.mxu0 %v1783
  %2332 = vmatprep.subr.bf16.mxu0 0
  %2333 = vmatpush1.bf16.msra.mxu0 %v1782
  %2334 = vmatprep.subr.bf16.mxu0 0
  %2335 = vmatpush2.bf16.msra.mxu0 %v1797
  %2336 = vmatprep.subr.bf16.mxu0 0
  %2337 = vmatpush2.bf16.msra.mxu0 %v1796
  %2338 = vmatprep.subr.bf16.mxu0 0
  %2339 = vmatpush2.bf16.msra.mxu0 %v1795
  %2340 = vmatprep.subr.bf16.mxu0 0
  %2341 = vmatpush2.bf16.msra.mxu0 %v1794
  %2342 = vmatprep.subr.bf16.mxu0 0
  %2343 = vmatpush2.bf16.msra.mxu0 %v1793
  %2344 = vmatprep.subr.bf16.mxu0 0
  %2345 = vmatpush2.bf16.msra.mxu0 %v1792
  %2346 = vmatprep.subr.bf16.mxu0 0
  %2347 = vmatpush2.bf16.msra.mxu0 %v1791
  %2348 = vmatprep.subr.bf16.mxu0 0
  %2349 = vmatpush2.bf16.msra.mxu0 %v1790
  %2350 = vmatprep.mubr.bf16.mxu0 %v201
  %2351 = vmatmul.mubr.bf16.gmra.mxu0 %v200
  %v2352 = vpop.f32.mrf.mxu0
  %v2353 = vadd.f32 %v2313, %v2352
  %v2354 = vpop.f32.mrf.mxu0
  %v2355 = vpop.f32.mrf.mxu0
  %v2356 = vpop.f32.mrf.mxu0
  %2357 = vdwg.mxu0
  %2358 = vmatprep.subr.bf16.mxu0 0
  %2359 = vmatpush1.bf16.msra.mxu0 %v1805
  %2360 = vmatprep.subr.bf16.mxu0 0
  %2361 = vmatpush1.bf16.msra.mxu0 %v1804
  %2362 = vmatprep.subr.bf16.mxu0 0
  %2363 = vmatpush1.bf16.msra.mxu0 %v1803
  %2364 = vmatprep.subr.bf16.mxu0 0
  %2365 = vmatpush1.bf16.msra.mxu0 %v1802
  %2366 = vmatprep.subr.bf16.mxu0 0
  %2367 = vmatpush1.bf16.msra.mxu0 %v1801
  %2368 = vmatprep.subr.bf16.mxu0 0
  %2369 = vmatpush1.bf16.msra.mxu0 %v1800
  %2370 = vmatprep.subr.bf16.mxu0 0
  %2371 = vmatpush1.bf16.msra.mxu0 %v1799
  %2372 = vmatprep.subr.bf16.mxu0 0
  %2373 = vmatpush1.bf16.msra.mxu0 %v1798
  %2374 = vmatprep.subr.bf16.mxu0 0
  %2375 = vmatpush2.bf16.msra.mxu0 %v1813
  %2376 = vmatprep.subr.bf16.mxu0 0
  %2377 = vmatpush2.bf16.msra.mxu0 %v1812
  %2378 = vmatprep.subr.bf16.mxu0 0
  %2379 = vmatpush2.bf16.msra.mxu0 %v1811
  %2380 = vmatprep.subr.bf16.mxu0 0
  %2381 = vmatpush2.bf16.msra.mxu0 %v1810
  %2382 = vmatprep.subr.bf16.mxu0 0
  %2383 = vmatpush2.bf16.msra.mxu0 %v1809
  %2384 = vmatprep.subr.bf16.mxu0 0
  %2385 = vmatpush2.bf16.msra.mxu0 %v1808
  %2386 = vmatprep.subr.bf16.mxu0 0
  %2387 = vmatpush2.bf16.msra.mxu0 %v1807
  %2388 = vmatprep.subr.bf16.mxu0 0
  %2389 = vmatpush2.bf16.msra.mxu0 %v1806
  %2390 = vmatprep.mubr.bf16.mxu0 %v203
  %2391 = vmatmul.mubr.bf16.gmra.mxu0 %v202
  %v2392 = vpop.f32.mrf.mxu0
  %v2393 = vadd.f32 %v2353, %v2392
  %v2394 = vpop.f32.mrf.mxu0
  %v2395 = vpop.f32.mrf.mxu0
  %v2396 = vpop.f32.mrf.mxu0
  %2397 = vdwg.mxu0
  %2398 = vmatprep.subr.bf16.mxu0 0
  %2399 = vmatpush1.bf16.msra.mxu0 %v1821
  %2400 = vmatprep.subr.bf16.mxu0 0
  %2401 = vmatpush1.bf16.msra.mxu0 %v1820
  %2402 = vmatprep.subr.bf16.mxu0 0
  %2403 = vmatpush1.bf16.msra.mxu0 %v1819
  %2404 = vmatprep.subr.bf16.mxu0 0
  %2405 = vmatpush1.bf16.msra.mxu0 %v1818
  %2406 = vmatprep.subr.bf16.mxu0 0
  %2407 = vmatpush1.bf16.msra.mxu0 %v1817
  %2408 = vmatprep.subr.bf16.mxu0 0
  %2409 = vmatpush1.bf16.msra.mxu0 %v1816
  %2410 = vmatprep.subr.bf16.mxu0 0
  %2411 = vmatpush1.bf16.msra.mxu0 %v1815
  %2412 = vmatprep.subr.bf16.mxu0 0
  %2413 = vmatpush1.bf16.msra.mxu0 %v1814
  %2414 = vmatprep.subr.bf16.mxu0 0
  %2415 = vmatpush2.bf16.msra.mxu0 %v1829
  %2416 = vmatprep.subr.bf16.mxu0 0
  %2417 = vmatpush2.bf16.msra.mxu0 %v1828
  %2418 = vmatprep.subr.bf16.mxu0 0
  %2419 = vmatpush2.bf16.msra.mxu0 %v1827
  %2420 = vmatprep.subr.bf16.mxu0 0
  %2421 = vmatpush2.bf16.msra.mxu0 %v1826
  %2422 = vmatprep.subr.bf16.mxu0 0
  %2423 = vmatpush2.bf16.msra.mxu0 %v1825
  %2424 = vmatprep.subr.bf16.mxu0 0
  %2425 = vmatpush2.bf16.msra.mxu0 %v1824
  %2426 = vmatprep.subr.bf16.mxu0 0
  %2427 = vmatpush2.bf16.msra.mxu0 %v1823
  %2428 = vmatprep.subr.bf16.mxu0 0
  %2429 = vmatpush2.bf16.msra.mxu0 %v1822
  %2430 = vmatprep.mubr.bf16.mxu0 %v205
  %2431 = vmatmul.mubr.bf16.gmra.mxu0 %v204
  %v2432 = vpop.f32.mrf.mxu0
  %v2433 = vadd.f32 %v2393, %v2432
  %v2434 = vpop.f32.mrf.mxu0
  %v2435 = vpop.f32.mrf.mxu0
  %v2436 = vpop.f32.mrf.mxu0
  %2437 = vdwg.mxu0
  %2438 = vmatprep.subr.bf16.mxu0 0
  %2439 = vmatpush1.bf16.msra.mxu0 %v1837
  %2440 = vmatprep.subr.bf16.mxu0 0
  %2441 = vmatpush1.bf16.msra.mxu0 %v1836
  %2442 = vmatprep.subr.bf16.mxu0 0
  %2443 = vmatpush1.bf16.msra.mxu0 %v1835
  %2444 = vmatprep.subr.bf16.mxu0 0
  %2445 = vmatpush1.bf16.msra.mxu0 %v1834
  %2446 = vmatprep.subr.bf16.mxu0 0
  %2447 = vmatpush1.bf16.msra.mxu0 %v1833
  %2448 = vmatprep.subr.bf16.mxu0 0
  %2449 = vmatpush1.bf16.msra.mxu0 %v1832
  %2450 = vmatprep.subr.bf16.mxu0 0
  %2451 = vmatpush1.bf16.msra.mxu0 %v1831
  %2452 = vmatprep.subr.bf16.mxu0 0
  %2453 = vmatpush1.bf16.msra.mxu0 %v1830
  %2454 = vmatprep.subr.bf16.mxu0 0
  %2455 = vmatpush2.bf16.msra.mxu0 %v1845
  %2456 = vmatprep.subr.bf16.mxu0 0
  %2457 = vmatpush2.bf16.msra.mxu0 %v1844
  %2458 = vmatprep.subr.bf16.mxu0 0
  %2459 = vmatpush2.bf16.msra.mxu0 %v1843
  %2460 = vmatprep.subr.bf16.mxu0 0
  %2461 = vmatpush2.bf16.msra.mxu0 %v1842
  %2462 = vmatprep.subr.bf16.mxu0 0
  %2463 = vmatpush2.bf16.msra.mxu0 %v1841
  %2464 = vmatprep.subr.bf16.mxu0 0
  %2465 = vmatpush2.bf16.msra.mxu0 %v1840
  %2466 = vmatprep.subr.bf16.mxu0 0
  %2467 = vmatpush2.bf16.msra.mxu0 %v1839
  %2468 = vmatprep.subr.bf16.mxu0 0
  %2469 = vmatpush2.bf16.msra.mxu0 %v1838
  %2470 = vmatprep.mubr.bf16.mxu0 %v207
  %2471 = vmatmul.mubr.bf16.gmra.mxu0 %v206
  %v2472 = vpop.f32.mrf.mxu0
  %v2473 = vadd.f32 %v2433, %v2472
  %v2474 = vpop.f32.mrf.mxu0
  %v2475 = vpop.f32.mrf.mxu0
  %v2476 = vpop.f32.mrf.mxu0
  %2477 = vdwg.mxu0
  %2478 = vmatprep.subr.bf16.mxu0 0
  %2479 = vmatpush1.bf16.msra.mxu0 %v1853
  %2480 = vmatprep.subr.bf16.mxu0 0
  %2481 = vmatpush1.bf16.msra.mxu0 %v1852
  %2482 = vmatprep.subr.bf16.mxu0 0
  %2483 = vmatpush1.bf16.msra.mxu0 %v1851
  %2484 = vmatprep.subr.bf16.mxu0 0
  %2485 = vmatpush1.bf16.msra.mxu0 %v1850
  %2486 = vmatprep.subr.bf16.mxu0 0
  %2487 = vmatpush1.bf16.msra.mxu0 %v1849
  %2488 = vmatprep.subr.bf16.mxu0 0
  %2489 = vmatpush1.bf16.msra.mxu0 %v1848
  %2490 = vmatprep.subr.bf16.mxu0 0
  %2491 = vmatpush1.bf16.msra.mxu0 %v1847
  %2492 = vmatprep.subr.bf16.mxu0 0
  %2493 = vmatpush1.bf16.msra.mxu0 %v1846
  %2494 = vmatprep.subr.bf16.mxu0 0
  %2495 = vmatpush2.bf16.msra.mxu0 %v1861
  %2496 = vmatprep.subr.bf16.mxu0 0
  %2497 = vmatpush2.bf16.msra.mxu0 %v1860
  %2498 = vmatprep.subr.bf16.mxu0 0
  %2499 = vmatpush2.bf16.msra.mxu0 %v1859
  %2500 = vmatprep.subr.bf16.mxu0 0
  %2501 = vmatpush2.bf16.msra.mxu0 %v1858
  %2502 = vmatprep.subr.bf16.mxu0 0
  %2503 = vmatpush2.bf16.msra.mxu0 %v1857
  %2504 = vmatprep.subr.bf16.mxu0 0
  %2505 = vmatpush2.bf16.msra.mxu0 %v1856
  %2506 = vmatprep.subr.bf16.mxu0 0
  %2507 = vmatpush2.bf16.msra.mxu0 %v1855
  %2508 = vmatprep.subr.bf16.mxu0 0
  %2509 = vmatpush2.bf16.msra.mxu0 %v1854
  %2510 = vmatprep.mubr.bf16.mxu0 %v209
  %2511 = vmatmul.mubr.bf16.gmra.mxu0 %v208
  %v2512 = vpop.f32.mrf.mxu0
  %v2513 = vadd.f32 %v2473, %v2512
  %v2514 = vpop.f32.mrf.mxu0
  %v2515 = vpop.f32.mrf.mxu0
  %v2516 = vpop.f32.mrf.mxu0
  %2517 = vdwg.mxu0
  %2518 = vmatprep.subr.bf16.mxu0 0
  %2519 = vmatpush1.bf16.msra.mxu0 %v1869
  %2520 = vmatprep.subr.bf16.mxu0 0
  %2521 = vmatpush1.bf16.msra.mxu0 %v1868
  %2522 = vmatprep.subr.bf16.mxu0 0
  %2523 = vmatpush1.bf16.msra.mxu0 %v1867
  %2524 = vmatprep.subr.bf16.mxu0 0
  %2525 = vmatpush1.bf16.msra.mxu0 %v1866
  %2526 = vmatprep.subr.bf16.mxu0 0
  %2527 = vmatpush1.bf16.msra.mxu0 %v1865
  %2528 = vmatprep.subr.bf16.mxu0 0
  %2529 = vmatpush1.bf16.msra.mxu0 %v1864
  %2530 = vmatprep.subr.bf16.mxu0 0
  %2531 = vmatpush1.bf16.msra.mxu0 %v1863
  %2532 = vmatprep.subr.bf16.mxu0 0
  %2533 = vmatpush1.bf16.msra.mxu0 %v1862
  %2534 = vmatprep.subr.bf16.mxu0 0
  %2535 = vmatpush2.bf16.msra.mxu0 %v1877
  %2536 = vmatprep.subr.bf16.mxu0 0
  %2537 = vmatpush2.bf16.msra.mxu0 %v1876
  %2538 = vmatprep.subr.bf16.mxu0 0
  %2539 = vmatpush2.bf16.msra.mxu0 %v1875
  %2540 = vmatprep.subr.bf16.mxu0 0
  %2541 = vmatpush2.bf16.msra.mxu0 %v1874
  %2542 = vmatprep.subr.bf16.mxu0 0
  %2543 = vmatpush2.bf16.msra.mxu0 %v1873
  %2544 = vmatprep.subr.bf16.mxu0 0
  %2545 = vmatpush2.bf16.msra.mxu0 %v1872
  %2546 = vmatprep.subr.bf16.mxu0 0
  %2547 = vmatpush2.bf16.msra.mxu0 %v1871
  %2548 = vmatprep.subr.bf16.mxu0 0
  %2549 = vmatpush2.bf16.msra.mxu0 %v1870
  %2550 = vmatprep.mubr.bf16.mxu0 %v211
  %2551 = vmatmul.mubr.bf16.gmra.mxu0 %v210
  %v2552 = vpop.f32.mrf.mxu0
  %v2553 = vadd.f32 %v2513, %v2552
  %v2554 = vpop.f32.mrf.mxu0
  %v2555 = vpop.f32.mrf.mxu0
  %v2556 = vpop.f32.mrf.mxu0
  %2557 = vdwg.mxu0
  %2558 = vmatprep.subr.bf16.mxu0 0
  %2559 = vmatpush1.bf16.msra.mxu0 %v1885
  %2560 = vmatprep.subr.bf16.mxu0 0
  %2561 = vmatpush1.bf16.msra.mxu0 %v1884
  %2562 = vmatprep.subr.bf16.mxu0 0
  %2563 = vmatpush1.bf16.msra.mxu0 %v1883
  %2564 = vmatprep.subr.bf16.mxu0 0
  %2565 = vmatpush1.bf16.msra.mxu0 %v1882
  %2566 = vmatprep.subr.bf16.mxu0 0
  %2567 = vmatpush1.bf16.msra.mxu0 %v1881
  %2568 = vmatprep.subr.bf16.mxu0 0
  %2569 = vmatpush1.bf16.msra.mxu0 %v1880
  %2570 = vmatprep.subr.bf16.mxu0 0
  %2571 = vmatpush1.bf16.msra.mxu0 %v1879
  %2572 = vmatprep.subr.bf16.mxu0 0
  %2573 = vmatpush1.bf16.msra.mxu0 %v1878
  %2574 = vmatprep.subr.bf16.mxu0 0
  %2575 = vmatpush2.bf16.msra.mxu0 %v1893
  %2576 = vmatprep.subr.bf16.mxu0 0
  %2577 = vmatpush2.bf16.msra.mxu0 %v1892
  %2578 = vmatprep.subr.bf16.mxu0 0
  %2579 = vmatpush2.bf16.msra.mxu0 %v1891
  %2580 = vmatprep.subr.bf16.mxu0 0
  %2581 = vmatpush2.bf16.msra.mxu0 %v1890
  %2582 = vmatprep.subr.bf16.mxu0 0
  %2583 = vmatpush2.bf16.msra.mxu0 %v1889
  %2584 = vmatprep.subr.bf16.mxu0 0
  %2585 = vmatpush2.bf16.msra.mxu0 %v1888
  %2586 = vmatprep.subr.bf16.mxu0 0
  %2587 = vmatpush2.bf16.msra.mxu0 %v1887
  %2588 = vmatprep.subr.bf16.mxu0 0
  %2589 = vmatpush2.bf16.msra.mxu0 %v1886
  %2590 = vmatprep.mubr.bf16.mxu0 %v213
  %2591 = vmatmul.mubr.bf16.gmra.mxu0 %v212
  %v2592 = vpop.f32.mrf.mxu0
  %v2593 = vadd.f32 %v2553, %v2592
  %v2594 = vpop.f32.mrf.mxu0
  %v2595 = vpop.f32.mrf.mxu0
  %v2596 = vpop.f32.mrf.mxu0
  %2597 = vdwg.mxu0
  %2598 = vmatprep.subr.bf16.mxu0 0
  %2599 = vmatpush1.bf16.msra.mxu0 %v1901
  %2600 = vmatprep.subr.bf16.mxu0 0
  %2601 = vmatpush1.bf16.msra.mxu0 %v1900
  %2602 = vmatprep.subr.bf16.mxu0 0
  %2603 = vmatpush1.bf16.msra.mxu0 %v1899
  %2604 = vmatprep.subr.bf16.mxu0 0
  %2605 = vmatpush1.bf16.msra.mxu0 %v1898
  %2606 = vmatprep.subr.bf16.mxu0 0
  %2607 = vmatpush1.bf16.msra.mxu0 %v1897
  %2608 = vmatprep.subr.bf16.mxu0 0
  %2609 = vmatpush1.bf16.msra.mxu0 %v1896
  %2610 = vmatprep.subr.bf16.mxu0 0
  %2611 = vmatpush1.bf16.msra.mxu0 %v1895
  %2612 = vmatprep.subr.bf16.mxu0 0
  %2613 = vmatpush1.bf16.msra.mxu0 %v1894
  %2614 = vmatprep.subr.bf16.mxu0 0
  %2615 = vmatpush2.bf16.msra.mxu0 %v1909
  %2616 = vmatprep.subr.bf16.mxu0 0
  %2617 = vmatpush2.bf16.msra.mxu0 %v1908
  %2618 = vmatprep.subr.bf16.mxu0 0
  %2619 = vmatpush2.bf16.msra.mxu0 %v1907
  %2620 = vmatprep.subr.bf16.mxu0 0
  %2621 = vmatpush2.bf16.msra.mxu0 %v1906
  %2622 = vmatprep.subr.bf16.mxu0 0
  %2623 = vmatpush2.bf16.msra.mxu0 %v1905
  %2624 = vmatprep.subr.bf16.mxu0 0
  %2625 = vmatpush2.bf16.msra.mxu0 %v1904
  %2626 = vmatprep.subr.bf16.mxu0 0
  %2627 = vmatpush2.bf16.msra.mxu0 %v1903
  %2628 = vmatprep.subr.bf16.mxu0 0
  %2629 = vmatpush2.bf16.msra.mxu0 %v1902
  %2630 = vmatprep.mubr.bf16.mxu0 %v215
  %2631 = vmatmul.mubr.bf16.gmra.mxu0 %v214
  %v2632 = vpop.f32.mrf.mxu0
  %v2633 = vadd.f32 %v2593, %v2632
  %v2634 = vpop.f32.mrf.mxu0
  %v2635 = vpop.f32.mrf.mxu0
  %v2636 = vpop.f32.mrf.mxu0
  %2637 = vdwg.mxu0
  %2638 = vmatprep.subr.bf16.mxu0 0
  %2639 = vmatpush1.bf16.msra.mxu0 %v1917
  %2640 = vmatprep.subr.bf16.mxu0 0
  %2641 = vmatpush1.bf16.msra.mxu0 %v1916
  %2642 = vmatprep.subr.bf16.mxu0 0
  %2643 = vmatpush1.bf16.msra.mxu0 %v1915
  %2644 = vmatprep.subr.bf16.mxu0 0
  %2645 = vmatpush1.bf16.msra.mxu0 %v1914
  %2646 = vmatprep.subr.bf16.mxu0 0
  %2647 = vmatpush1.bf16.msra.mxu0 %v1913
  %2648 = vmatprep.subr.bf16.mxu0 0
  %2649 = vmatpush1.bf16.msra.mxu0 %v1912
  %2650 = vmatprep.subr.bf16.mxu0 0
  %2651 = vmatpush1.bf16.msra.mxu0 %v1911
  %2652 = vmatprep.subr.bf16.mxu0 0
  %2653 = vmatpush1.bf16.msra.mxu0 %v1910
  %2654 = vmatprep.subr.bf16.mxu0 0
  %2655 = vmatpush2.bf16.msra.mxu0 %v1925
  %2656 = vmatprep.subr.bf16.mxu0 0
  %2657 = vmatpush2.bf16.msra.mxu0 %v1924
  %2658 = vmatprep.subr.bf16.mxu0 0
  %2659 = vmatpush2.bf16.msra.mxu0 %v1923
  %2660 = vmatprep.subr.bf16.mxu0 0
  %2661 = vmatpush2.bf16.msra.mxu0 %v1922
  %2662 = vmatprep.subr.bf16.mxu0 0
  %2663 = vmatpush2.bf16.msra.mxu0 %v1921
  %2664 = vmatprep.subr.bf16.mxu0 0
  %2665 = vmatpush2.bf16.msra.mxu0 %v1920
  %2666 = vmatprep.subr.bf16.mxu0 0
  %2667 = vmatpush2.bf16.msra.mxu0 %v1919
  %2668 = vmatprep.subr.bf16.mxu0 0
  %2669 = vmatpush2.bf16.msra.mxu0 %v1918
  %2670 = vmatprep.mubr.bf16.mxu0 %v217
  %2671 = vmatmul.mubr.bf16.gmra.mxu0 %v216
  %v2672 = vpop.f32.mrf.mxu0
  %v2673 = vadd.f32 %v2633, %v2672
  %v2674 = vpop.f32.mrf.mxu0
  %v2675 = vpop.f32.mrf.mxu0
  %v2676 = vpop.f32.mrf.mxu0
  %2677 = vdwg.mxu0
  %2678 = vmatprep.subr.bf16.mxu0 0
  %2679 = vmatpush1.bf16.msra.mxu0 %v1933
  %2680 = vmatprep.subr.bf16.mxu0 0
  %2681 = vmatpush1.bf16.msra.mxu0 %v1932
  %2682 = vmatprep.subr.bf16.mxu0 0
  %2683 = vmatpush1.bf16.msra.mxu0 %v1931
  %2684 = vmatprep.subr.bf16.mxu0 0
  %2685 = vmatpush1.bf16.msra.mxu0 %v1930
  %2686 = vmatprep.subr.bf16.mxu0 0
  %2687 = vmatpush1.bf16.msra.mxu0 %v1929
  %2688 = vmatprep.subr.bf16.mxu0 0
  %2689 = vmatpush1.bf16.msra.mxu0 %v1928
  %2690 = vmatprep.subr.bf16.mxu0 0
  %2691 = vmatpush1.bf16.msra.mxu0 %v1927
  %2692 = vmatprep.subr.bf16.mxu0 0
  %2693 = vmatpush1.bf16.msra.mxu0 %v1926
  %2694 = vmatprep.subr.bf16.mxu0 0
  %2695 = vmatpush2.bf16.msra.mxu0 %v1941
  %2696 = vmatprep.subr.bf16.mxu0 0
  %2697 = vmatpush2.bf16.msra.mxu0 %v1940
  %2698 = vmatprep.subr.bf16.mxu0 0
  %2699 = vmatpush2.bf16.msra.mxu0 %v1939
  %2700 = vmatprep.subr.bf16.mxu0 0
  %2701 = vmatpush2.bf16.msra.mxu0 %v1938
  %2702 = vmatprep.subr.bf16.mxu0 0
  %2703 = vmatpush2.bf16.msra.mxu0 %v1937
  %2704 = vmatprep.subr.bf16.mxu0 0
  %2705 = vmatpush2.bf16.msra.mxu0 %v1936
  %2706 = vmatprep.subr.bf16.mxu0 0
  %2707 = vmatpush2.bf16.msra.mxu0 %v1935
  %2708 = vmatprep.subr.bf16.mxu0 0
  %2709 = vmatpush2.bf16.msra.mxu0 %v1934
  %2710 = vmatprep.mubr.bf16.mxu0 %v219
  %2711 = vmatmul.mubr.bf16.gmra.mxu0 %v218
  %v2712 = vpop.f32.mrf.mxu0
  %v2713 = vadd.f32 %v2673, %v2712
  %v2714 = vpop.f32.mrf.mxu0
  %v2715 = vpop.f32.mrf.mxu0
  %v2716 = vpop.f32.mrf.mxu0
  %2717 = vdwg.mxu0
  %2718 = vmatprep.subr.bf16.mxu0 0
  %2719 = vmatpush1.bf16.msra.mxu0 %v1949
  %2720 = vmatprep.subr.bf16.mxu0 0
  %2721 = vmatpush1.bf16.msra.mxu0 %v1948
  %2722 = vmatprep.subr.bf16.mxu0 0
  %2723 = vmatpush1.bf16.msra.mxu0 %v1947
  %2724 = vmatprep.subr.bf16.mxu0 0
  %2725 = vmatpush1.bf16.msra.mxu0 %v1946
  %2726 = vmatprep.subr.bf16.mxu0 0
  %2727 = vmatpush1.bf16.msra.mxu0 %v1945
  %2728 = vmatprep.subr.bf16.mxu0 0
  %2729 = vmatpush1.bf16.msra.mxu0 %v1944
  %2730 = vmatprep.subr.bf16.mxu0 0
  %2731 = vmatpush1.bf16.msra.mxu0 %v1943
  %2732 = vmatprep.subr.bf16.mxu0 0
  %2733 = vmatpush1.bf16.msra.mxu0 %v1942
  %2734 = vmatprep.subr.bf16.mxu0 0
  %2735 = vmatpush2.bf16.msra.mxu0 %v1957
  %2736 = vmatprep.subr.bf16.mxu0 0
  %2737 = vmatpush2.bf16.msra.mxu0 %v1956
  %2738 = vmatprep.subr.bf16.mxu0 0
  %2739 = vmatpush2.bf16.msra.mxu0 %v1955
  %2740 = vmatprep.subr.bf16.mxu0 0
  %2741 = vmatpush2.bf16.msra.mxu0 %v1954
  %2742 = vmatprep.subr.bf16.mxu0 0
  %2743 = vmatpush2.bf16.msra.mxu0 %v1953
  %2744 = vmatprep.subr.bf16.mxu0 0
  %2745 = vmatpush2.bf16.msra.mxu0 %v1952
  %2746 = vmatprep.subr.bf16.mxu0 0
  %2747 = vmatpush2.bf16.msra.mxu0 %v1951
  %2748 = vmatprep.subr.bf16.mxu0 0
  %2749 = vmatpush2.bf16.msra.mxu0 %v1950
  %2750 = vmatprep.mubr.bf16.mxu0 %v221
  %2751 = vmatmul.mubr.bf16.gmra.mxu0 %v220
  %v2752 = vpop.f32.mrf.mxu0
  %v2753 = vadd.f32 %v2713, %v2752
  %v2754 = vpop.f32.mrf.mxu0
  %v2755 = vpop.f32.mrf.mxu0
  %v2756 = vpop.f32.mrf.mxu0
  %2757 = vdwg.mxu0
  %2758 = vmatprep.subr.bf16.mxu0 0
  %2759 = vmatpush1.bf16.msra.mxu0 %v1965
  %2760 = vmatprep.subr.bf16.mxu0 0
  %2761 = vmatpush1.bf16.msra.mxu0 %v1964
  %2762 = vmatprep.subr.bf16.mxu0 0
  %2763 = vmatpush1.bf16.msra.mxu0 %v1963
  %2764 = vmatprep.subr.bf16.mxu0 0
  %2765 = vmatpush1.bf16.msra.mxu0 %v1962
  %2766 = vmatprep.subr.bf16.mxu0 0
  %2767 = vmatpush1.bf16.msra.mxu0 %v1961
  %2768 = vmatprep.subr.bf16.mxu0 0
  %2769 = vmatpush1.bf16.msra.mxu0 %v1960
  %2770 = vmatprep.subr.bf16.mxu0 0
  %2771 = vmatpush1.bf16.msra.mxu0 %v1959
  %2772 = vmatprep.subr.bf16.mxu0 0
  %2773 = vmatpush1.bf16.msra.mxu0 %v1958
  %2774 = vmatprep.subr.bf16.mxu0 0
  %2775 = vmatpush2.bf16.msra.mxu0 %v1973
  %2776 = vmatprep.subr.bf16.mxu0 0
  %2777 = vmatpush2.bf16.msra.mxu0 %v1972
  %2778 = vmatprep.subr.bf16.mxu0 0
  %2779 = vmatpush2.bf16.msra.mxu0 %v1971
  %2780 = vmatprep.subr.bf16.mxu0 0
  %2781 = vmatpush2.bf16.msra.mxu0 %v1970
  %2782 = vmatprep.subr.bf16.mxu0 0
  %2783 = vmatpush2.bf16.msra.mxu0 %v1969
  %2784 = vmatprep.subr.bf16.mxu0 0
  %2785 = vmatpush2.bf16.msra.mxu0 %v1968
  %2786 = vmatprep.subr.bf16.mxu0 0
  %2787 = vmatpush2.bf16.msra.mxu0 %v1967
  %2788 = vmatprep.subr.bf16.mxu0 0
  %2789 = vmatpush2.bf16.msra.mxu0 %v1966
  %2790 = vmatprep.mubr.bf16.mxu0 %v223
  %2791 = vmatmul.mubr.bf16.gmra.mxu0 %v222
  %v2792 = vpop.f32.mrf.mxu0
  %v2793 = vadd.f32 %v2753, %v2792
  %v2794 = vpop.f32.mrf.mxu0
  %v2795 = vpop.f32.mrf.mxu0
  %v2796 = vpop.f32.mrf.mxu0
  %2797 = vdwg.mxu0
  %2798 = vmatprep.subr.bf16.mxu0 0
  %2799 = vmatpush1.bf16.msra.mxu0 %v1981
  %2800 = vmatprep.subr.bf16.mxu0 0
  %2801 = vmatpush1.bf16.msra.mxu0 %v1980
  %2802 = vmatprep.subr.bf16.mxu0 0
  %2803 = vmatpush1.bf16.msra.mxu0 %v1979
  %2804 = vmatprep.subr.bf16.mxu0 0
  %2805 = vmatpush1.bf16.msra.mxu0 %v1978
  %2806 = vmatprep.subr.bf16.mxu0 0
  %2807 = vmatpush1.bf16.msra.mxu0 %v1977
  %2808 = vmatprep.subr.bf16.mxu0 0
  %2809 = vmatpush1.bf16.msra.mxu0 %v1976
  %2810 = vmatprep.subr.bf16.mxu0 0
  %2811 = vmatpush1.bf16.msra.mxu0 %v1975
  %2812 = vmatprep.subr.bf16.mxu0 0
  %2813 = vmatpush1.bf16.msra.mxu0 %v1974
  %2814 = vmatprep.subr.bf16.mxu0 0
  %2815 = vmatpush2.bf16.msra.mxu0 %v1989
  %2816 = vmatprep.subr.bf16.mxu0 0
  %2817 = vmatpush2.bf16.msra.mxu0 %v1988
  %2818 = vmatprep.subr.bf16.mxu0 0
  %2819 = vmatpush2.bf16.msra.mxu0 %v1987
  %2820 = vmatprep.subr.bf16.mxu0 0
  %2821 = vmatpush2.bf16.msra.mxu0 %v1986
  %2822 = vmatprep.subr.bf16.mxu0 0
  %2823 = vmatpush2.bf16.msra.mxu0 %v1985
  %2824 = vmatprep.subr.bf16.mxu0 0
  %2825 = vmatpush2.bf16.msra.mxu0 %v1984
  %2826 = vmatprep.subr.bf16.mxu0 0
  %2827 = vmatpush2.bf16.msra.mxu0 %v1983
  %2828 = vmatprep.subr.bf16.mxu0 0
  %2829 = vmatpush2.bf16.msra.mxu0 %v1982
  %2830 = vmatprep.mubr.bf16.mxu0 %v225
  %2831 = vmatmul.mubr.bf16.gmra.mxu0 %v224
  %v2832 = vpop.f32.mrf.mxu0
  %v2833 = vadd.f32 %v2793, %v2832
  %v2834 = vpop.f32.mrf.mxu0
  %v2835 = vpop.f32.mrf.mxu0
  %v2836 = vpop.f32.mrf.mxu0
  %2837 = vdwg.mxu0
  %2838 = vmatprep.subr.bf16.mxu0 0
  %2839 = vmatpush1.bf16.msra.mxu0 %v1997
  %2840 = vmatprep.subr.bf16.mxu0 0
  %2841 = vmatpush1.bf16.msra.mxu0 %v1996
  %2842 = vmatprep.subr.bf16.mxu0 0
  %2843 = vmatpush1.bf16.msra.mxu0 %v1995
  %2844 = vmatprep.subr.bf16.mxu0 0
  %2845 = vmatpush1.bf16.msra.mxu0 %v1994
  %2846 = vmatprep.subr.bf16.mxu0 0
  %2847 = vmatpush1.bf16.msra.mxu0 %v1993
  %2848 = vmatprep.subr.bf16.mxu0 0
  %2849 = vmatpush1.bf16.msra.mxu0 %v1992
  %2850 = vmatprep.subr.bf16.mxu0 0
  %2851 = vmatpush1.bf16.msra.mxu0 %v1991
  %2852 = vmatprep.subr.bf16.mxu0 0
  %2853 = vmatpush1.bf16.msra.mxu0 %v1990
  %2854 = vmatprep.subr.bf16.mxu0 0
  %2855 = vmatpush2.bf16.msra.mxu0 %v2005
  %2856 = vmatprep.subr.bf16.mxu0 0
  %2857 = vmatpush2.bf16.msra.mxu0 %v2004
  %2858 = vmatprep.subr.bf16.mxu0 0
  %2859 = vmatpush2.bf16.msra.mxu0 %v2003
  %2860 = vmatprep.subr.bf16.mxu0 0
  %2861 = vmatpush2.bf16.msra.mxu0 %v2002
  %2862 = vmatprep.subr.bf16.mxu0 0
  %2863 = vmatpush2.bf16.msra.mxu0 %v2001
  %2864 = vmatprep.subr.bf16.mxu0 0
  %2865 = vmatpush2.bf16.msra.mxu0 %v2000
  %2866 = vmatprep.subr.bf16.mxu0 0
  %2867 = vmatpush2.bf16.msra.mxu0 %v1999
  %2868 = vmatprep.subr.bf16.mxu0 0
  %2869 = vmatpush2.bf16.msra.mxu0 %v1998
  %2870 = vmatprep.mubr.bf16.mxu0 %v227
  %2871 = vmatmul.mubr.bf16.gmra.mxu0 %v226
  %v2872 = vpop.f32.mrf.mxu0
  %v2873 = vadd.f32 %v2833, %v2872
  %v2874 = vpop.f32.mrf.mxu0
  %v2875 = vpop.f32.mrf.mxu0
  %v2876 = vpop.f32.mrf.mxu0
  %2877 = vdwg.mxu0
  %2878 = vmatprep.subr.bf16.mxu0 0
  %2879 = vmatpush1.bf16.msra.mxu0 %v2013
  %2880 = vmatprep.subr.bf16.mxu0 0
  %2881 = vmatpush1.bf16.msra.mxu0 %v2012
  %2882 = vmatprep.subr.bf16.mxu0 0
  %2883 = vmatpush1.bf16.msra.mxu0 %v2011
  %2884 = vmatprep.subr.bf16.mxu0 0
  %2885 = vmatpush1.bf16.msra.mxu0 %v2010
  %2886 = vmatprep.subr.bf16.mxu0 0
  %2887 = vmatpush1.bf16.msra.mxu0 %v2009
  %2888 = vmatprep.subr.bf16.mxu0 0
  %2889 = vmatpush1.bf16.msra.mxu0 %v2008
  %2890 = vmatprep.subr.bf16.mxu0 0
  %2891 = vmatpush1.bf16.msra.mxu0 %v2007
  %2892 = vmatprep.subr.bf16.mxu0 0
  %2893 = vmatpush1.bf16.msra.mxu0 %v2006
  %2894 = vmatprep.subr.bf16.mxu0 0
  %2895 = vmatpush2.bf16.msra.mxu0 %v2021
  %2896 = vmatprep.subr.bf16.mxu0 0
  %2897 = vmatpush2.bf16.msra.mxu0 %v2020
  %2898 = vmatprep.subr.bf16.mxu0 0
  %2899 = vmatpush2.bf16.msra.mxu0 %v2019
  %2900 = vmatprep.subr.bf16.mxu0 0
  %2901 = vmatpush2.bf16.msra.mxu0 %v2018
  %2902 = vmatprep.subr.bf16.mxu0 0
  %2903 = vmatpush2.bf16.msra.mxu0 %v2017
  %2904 = vmatprep.subr.bf16.mxu0 0
  %2905 = vmatpush2.bf16.msra.mxu0 %v2016
  %2906 = vmatprep.subr.bf16.mxu0 0
  %2907 = vmatpush2.bf16.msra.mxu0 %v2015
  %2908 = vmatprep.subr.bf16.mxu0 0
  %2909 = vmatpush2.bf16.msra.mxu0 %v2014
  %2910 = vmatprep.mubr.bf16.mxu0 %v229
  %2911 = vmatmul.mubr.bf16.gmra.mxu0 %v228
  %v2912 = vpop.f32.mrf.mxu0
  %v2913 = vadd.f32 %v2873, %v2912
  %v2914 = vpop.f32.mrf.mxu0
  %v2915 = vpop.f32.mrf.mxu0
  %v2916 = vpop.f32.mrf.mxu0
  %2917 = vdwg.mxu0
  %v2918 = vpack.c.bf16 %v2913, %v2913
  %2919 = vst [vmem:[%s2] sm:$0x1] %v2918
  %s2920 = smul.u32 0, 2
  %v2921 = vlaneseq
  %v2922 = vshrl.u32 %v2921, 7
  %v2923 = vstv %s2920
  %v2924 = vadd.s32 %v2923, %v2922
  %vm2925 = vcmp.lt.s32.totalorder %v2924, 2
  %v2926 = vsel %vm2925, 1, 0
  %vm2927 = vcmp.eq.s32.totalorder %v2926, 1
  %v2928 = vsel %vm2927, %v2913, 0.0
  %vm2929 = vcmask 1041408
  %v2930 = vsel %vm2929, %v2928, 0.0
  %v2931 = vrot.slane %v2930, 4
  %v2932 = vadd.f32 %v2930, %v2931
  %v2933 = vrot.slane %v2932, 2
  %v2934 = vadd.f32 %v2932, %v2933
  %v2935 = vrot.slane %v2934, 1
  %v2936 = vadd.f32 %v2934, %v2935
  %2937 = vst [vmem:[%s3] sm:$0x1] %v2936
  %v2938 = vmul.f32 %v2928, %v2928
  %v2939 = vsel %vm2929, %v2938, 0.0
  %v2940 = vrot.slane %v2939, 4
  %v2941 = vadd.f32 %v2939, %v2940
  %v2942 = vrot.slane %v2941, 2
  %v2943 = vadd.f32 %v2941, %v2942
  %v2944 = vrot.slane %v2943, 1
  %v2945 = vadd.f32 %v2943, %v2944
  %2946 = vst [vmem:[%s3 + $0x1] sm:$0x1] %v2945
  // Predicated region
  $region10: #{q_net_forward.2} parent=0 // pred_check
    _
  $region11: #{q_net_forward.2} parent=0 // pred_check_branch
    %2948 = sbr.rel (0) target = $region13
  $region12: #{q_net_forward.2} parent=0 // pred_region
    _
  $region13: #{q_net_forward.2} parent=0 // pred_fallthru
    _
  // Predicated region
  $region14: #{q_net_forward.2} parent=0 // pred_check
    _
  $region15: #{q_net_forward.2} parent=0 // pred_check_branch
    %2950 = sbr.rel (0) target = $region17
  $region16: #{q_net_forward.2} parent=0 // pred_region
    _
  $region17: #{q_net_forward.2} parent=0 // pred_fallthru
    _
  // Predicated region
  $region18: #{q_net_forward.2} parent=0 // pred_check
    _
  $region19: #{q_net_forward.2} parent=0 // pred_check_branch
    %2952 = sbr.rel (0) target = $region21
  $region20: #{q_net_forward.2} parent=0 // pred_region
    _
  $region21: #{q_net_forward.2} parent=0 // pred_fallthru
    _
  // Predicated region
  $region22: #{q_net_forward.2} parent=0 // pred_check
    _
  $region23: #{q_net_forward.2} parent=0 // pred_check_branch
    %2954 = sbr.rel (0) target = $region25
  $region24: #{q_net_forward.2} parent=0 // pred_region
    _
  $region25: #{q_net_forward.2} parent=0 // pred_fallthru
    _

</llo_original>
